<compile_context>
chip_gen: v7x
topology: tpu7x:2x2x1
jax: 0.10.0
libtpu: 0.0.40
codegen_flags: <defaults>
</compile_context>

<pallas_src>
import functools

import jax
import jax.numpy as jnp
from jax.experimental import pallas as pl
from jax.experimental.pallas import tpu as pltpu

INPUT_SIZE = 64
HIDDEN = 50
OUT_DIM = 40

GP = 64                 # per-gate lane-padded width (hidden 50 -> 64)
NGATES = 4
GATES_W = NGATES * GP   # 256
OUTP = 128              # lane-dense padded classifier output width


def lstm_fc_kernel(x_ref, wih_ref, whh_ref, b_ref, wfc_ref, bfc_ref,
                   out_ref, gx_ref, *, T, BT):
    # --- 1) Input projection for ALL timesteps of this batch tile in one MXU
    #        pass: (T*BT, 64) @ (64, 256), bias folded in.  x is already
    #        time-major within the tile, so no in-kernel reshape is needed.
    gx_ref[...] = (
        jnp.dot(x_ref[...], wih_ref[...], preferred_element_type=jnp.float32)
        + b_ref[...])

    # Loop-invariant recurrent weight: a single 64x256 bf16 MXU tile.
    w_hh = whh_ref[...]

    def sigmoid(z):
        # One EUP tanh instead of exp + reciprocal.
        return 0.5 * (jnp.tanh(0.5 * z) + 1.0)

    # --- 2) Recurrence over time, fully in-kernel. ---
    def step(t, carry):
        h, c = carry
        row0 = pl.multiple_of(t * BT, 8)
        gates = (gx_ref[pl.ds(row0, BT), :]
                 + jnp.dot(h.astype(jnp.bfloat16), w_hh,
                           preferred_element_type=jnp.float32))
        i_g = sigmoid(gates[:, 0 * GP:1 * GP])
        f_g = sigmoid(gates[:, 1 * GP:2 * GP])
        g_g = jnp.tanh(gates[:, 2 * GP:3 * GP])
        o_g = sigmoid(gates[:, 3 * GP:4 * GP])
        c = f_g * c + i_g * g_g
        h = o_g * jnp.tanh(c)
        return (h, c)

    h0 = jnp.zeros((BT, GP), jnp.float32)
    c0 = jnp.zeros((BT, GP), jnp.float32)
    h, _ = jax.lax.fori_loop(0, T, step, (h0, c0),
                             unroll=True if T <= 16 else 8)
    # TODO(synk): at very small batch the per-step h @ W_hh could pin W_hh in
    # MXU staging registers via pltpu.matmul_push_rhs / matmul_acc_lhs.

    # --- 3) Classifier head on the last hidden state (lane-dense 128 store).
    out_ref[...] = (
        jnp.dot(h.astype(jnp.bfloat16), wfc_ref[...],
                preferred_element_type=jnp.float32)
        + bfc_ref[...]).astype(out_ref.dtype)


@jax.jit
def rnn_classifier_forward(x, w_ih_pad, w_hh_pad, b_pad, w_fc_pad, b_fc_pad):
    B, T, I = x.shape
    assert I == INPUT_SIZE
    assert T > 0, "empty sequence: output would be undefined"

    # Batch tile: <= 64 rows keeps the recurrence spill-free; pad B up to a
    # whole number of tiles (f32 sublane multiple of 8).
    if B <= 64:
        BT = ((B + 7) // 8) * 8
        Bp = BT
    else:
        BT = 64
        Bp = ((B + BT - 1) // BT) * BT
    n_tiles = Bp // BT

    # One fused XLA pass: pad batch, group into batch tiles, go time-major
    # inside each tile, cast to bf16.  Kernel block b is (T*BT, 64) with row
    # index = t*BT + (batch row within tile).
    xp = x if Bp == B else jnp.pad(x, ((0, Bp - B), (0, 0), (0, 0)))
    x_tiles = jnp.transpose(
        xp.reshape(n_tiles, BT, T, INPUT_SIZE), (0, 2, 1, 3)
    ).astype(jnp.bfloat16).reshape(n_tiles, T * BT, INPUT_SIZE)

    # Scoped-VMEM budget from the actually-resident buffers (+ headroom).
    # TODO(synk): for very large T*B, chunk gx over a time window instead of
    # keeping all T timesteps resident (hits v7x's 64 MiB VMEM first).
    bytes_needed = (
        2 * (T * BT * INPUT_SIZE * 2)            # x block (bf16, 2 buffers)
        + T * BT * GATES_W * 4                   # gx scratch (f32)
        + 2 * ((INPUT_SIZE + GP) * GATES_W * 2   # W_ih + W_hh (bf16)
               + GP * OUTP * 2                   # W_fc (bf16)
               + (GATES_W + OUTP) * 4)           # biases (f32)
        + 2 * (BT * OUTP * 4))                   # out block (f32, 2 buffers)
    vmem_limit = min(max(int(bytes_needed * 1.5) + (2 << 20), 16 << 20),
                     100 << 20)

    out_padded = pl.pallas_call(
        functools.partial(lstm_fc_kernel, T=T, BT=BT),
        out_shape=jax.ShapeDtypeStruct((Bp, OUTP), jnp.float32),
        grid=(n_tiles,),
        in_specs=[
            pl.BlockSpec((None, T * BT, INPUT_SIZE), lambda b: (b, 0, 0)),
            pl.BlockSpec((INPUT_SIZE, GATES_W), lambda b: (0, 0)),
            pl.BlockSpec((GP, GATES_W), lambda b: (0, 0)),
            pl.BlockSpec((1, GATES_W), lambda b: (0, 0)),
            pl.BlockSpec((GP, OUTP), lambda b: (0, 0)),
            pl.BlockSpec((1, OUTP), lambda b: (0, 0)),
        ],
        out_specs=pl.BlockSpec((BT, OUTP), lambda b: (b, 0)),
        scratch_shapes=[pltpu.VMEM((T * BT, GATES_W), jnp.float32)],
        compiler_params=pltpu.CompilerParams(
            dimension_semantics=("parallel",),
            vmem_limit_bytes=vmem_limit),
    )(x_tiles, w_ih_pad, w_hh_pad, b_pad, w_fc_pad, b_fc_pad)

    return out_padded[:B, :OUT_DIM]


def prepare_params(w_ih, w_hh, b_ih, b_hh, w_fc, b_fc):
    """Torch layouts -> padded, lane-aligned, bf16 kernel layouts.

    w_ih: (4H, I), w_hh: (4H, H), b_*: (4H,), w_fc: (OUT, H), b_fc: (OUT,).
    Each gate occupies a 64-lane block; padded columns/rows are zero so the
    padded hidden/cell lanes stay exactly zero through the recurrence.
    """
    H = HIDDEN
    b = (b_ih + b_hh).astype(jnp.float32)
    w_ih_pad = jnp.zeros((INPUT_SIZE, GATES_W), jnp.float32)
    w_hh_pad = jnp.zeros((GP, GATES_W), jnp.float32)
    b_pad = jnp.zeros((1, GATES_W), jnp.float32)
    for g in range(NGATES):
        w_ih_pad = w_ih_pad.at[:, g * GP:g * GP + H].set(
            w_ih[g * H:(g + 1) * H, :].T)
        w_hh_pad = w_hh_pad.at[:H, g * GP:g * GP + H].set(
            w_hh[g * H:(g + 1) * H, :].T)
        b_pad = b_pad.at[0, g * GP:g * GP + H].set(b[g * H:(g + 1) * H])
    w_fc_pad = jnp.zeros((GP, OUTP), jnp.float32).at[:H, :OUT_DIM].set(w_fc.T)
    b_fc_pad = jnp.zeros((1, OUTP), jnp.float32).at[0, :OUT_DIM].set(b_fc)
    return (w_ih_pad.astype(jnp.bfloat16), w_hh_pad.astype(jnp.bfloat16),
            b_pad, w_fc_pad.astype(jnp.bfloat16), b_fc_pad)


def reference_forward(x, w_ih, w_hh, b_ih, b_hh, w_fc, b_fc):
    """Pure-JAX f32 reference replicating torch.nn.LSTM + Linear semantics."""
    B, T, _ = x.shape
    H = HIDDEN
    w_ih_t, w_hh_t, b = w_ih.T, w_hh.T, b_ih + b_hh

    def step(carry, x_t):
        h, c = carry
        gates = x_t @ w_ih_t + h @ w_hh_t + b
        i = jax.nn.sigmoid(gates[:, 0 * H:1 * H])
        f = jax.nn.sigmoid(gates[:, 1 * H:2 * H])
        g = jnp.tanh(gates[:, 2 * H:3 * H])
        o = jax.nn.sigmoid(gates[:, 3 * H:4 * H])
        c = f * c + i * g
        h = o * jnp.tanh(c)
        return (h, c), None

    init = (jnp.zeros((B, H), jnp.float32), jnp.zeros((B, H), jnp.float32))
    (h_last, _), _ = jax.lax.scan(step, init, jnp.transpose(x, (1, 0, 2)))
    return h_last @ w_fc.T + b_fc


def init_params(key):
    """Deterministic PyTorch-style init: uniform(-1/sqrt(H), 1/sqrt(H))."""
    ks = jax.random.split(key, 6)
    bound = 1.0 / jnp.sqrt(jnp.float32(HIDDEN))

    def u(k, shape):
        return jax.random.uniform(k, shape, jnp.float32, -bound, bound)

    w_ih = u(ks[0], (4 * HIDDEN, INPUT_SIZE))   # torch layout (4H, I)
    w_hh = u(ks[1], (4 * HIDDEN, HIDDEN))       # torch layout (4H, H)
    b_ih = u(ks[2], (4 * HIDDEN,))
    b_hh = u(ks[3], (4 * HIDDEN,))
    w_fc = u(ks[4], (OUT_DIM, HIDDEN))          # torch layout (40, 50)
    b_fc = u(ks[5], (OUT_DIM,))
    return w_ih, w_hh, b_ih, b_hh, w_fc, b_fc


if __name__ == "__main__":
    key = jax.random.PRNGKey(0)
    k_x, k_p = jax.random.split(key)

    B, T = 2, 8
    x = jax.random.normal(k_x, (B, T, INPUT_SIZE), jnp.float32)

    torch_params = init_params(k_p)
    kernel_params = prepare_params(*torch_params)

    out = rnn_classifier_forward(x, *kernel_params)
    out = jax.block_until_ready(out)
    assert out.shape == (B, OUT_DIM), out.shape

    ref = reference_forward(x, *torch_params)
    max_err = float(jnp.max(jnp.abs(out - ref)))
    # bf16 MXU operands with f32 accumulation -> loosened tolerance vs f32 ref.
    assert jnp.allclose(out, ref, atol=2e-2, rtol=2e-2), (
        f"kernel output mismatch vs reference (max abs err {max_err})")

    print("KERNEL_OK")
</pallas_src>

<mosaic_0001>
module attributes {stable_mosaic.version = 11 : i64} {
  func.func @lstm_fc_kernel(%arg0: i32, %arg1: memref<1x64x64xbf16, #tpu.memory_space<vmem>>, %arg2: memref<64x256xbf16, #tpu.memory_space<vmem>>, %arg3: memref<64x256xbf16, #tpu.memory_space<vmem>>, %arg4: memref<1x256xf32, #tpu.memory_space<vmem>>, %arg5: memref<64x128xbf16, #tpu.memory_space<vmem>>, %arg6: memref<1x128xf32, #tpu.memory_space<vmem>>, %arg7: memref<8x128xf32, #tpu.memory_space<vmem>>, %arg8: memref<64x256xf32, #tpu.memory_space<vmem>>) attributes {dimension_semantics = [#tpu.dimension_semantics<parallel>], iteration_bounds = array<i64: 1>, scalar_prefetch = 0 : i64, scratch_operands = 1 : i64, tpu.core_type = #tpu.core_type<tc>, window_params = [{transform_indices = @transform_0, window_bounds = array<i64: 1, 64, 64>}, {pipeline_mode = #tpu.pipeline_mode<synchronous>, transform_indices = @transform_1, window_bounds = array<i64: 64, 256>}, {pipeline_mode = #tpu.pipeline_mode<synchronous>, transform_indices = @transform_2, window_bounds = array<i64: 64, 256>}, {pipeline_mode = #tpu.pipeline_mode<synchronous>, transform_indices = @transform_3, window_bounds = array<i64: 1, 256>}, {pipeline_mode = #tpu.pipeline_mode<synchronous>, transform_indices = @transform_4, window_bounds = array<i64: 64, 128>}, {pipeline_mode = #tpu.pipeline_mode<synchronous>, transform_indices = @transform_5, window_bounds = array<i64: 1, 128>}, {transform_indices = @transform_6, window_bounds = array<i64: 8, 128>}]} {
    %c0 = arith.constant 0 : index
    %c0_0 = arith.constant 0 : index
    %c0_1 = arith.constant 0 : index
    %0 = vector.load %arg1[%c0, %c0_0, %c0_1] : memref<1x64x64xbf16, #tpu.memory_space<vmem>>, vector<1x64x64xbf16>
    %1 = vector.shape_cast %0 : vector<1x64x64xbf16> to vector<64x64xbf16>
    %c0_2 = arith.constant 0 : index
    %c0_3 = arith.constant 0 : index
    %2 = vector.load %arg2[%c0_2, %c0_3] : memref<64x256xbf16, #tpu.memory_space<vmem>>, vector<64x256xbf16>
    %cst = arith.constant dense<0.000000e+00> : vector<64x256xf32>
    %3 = tpu.matmul %1, %2, %cst {dimension_numbers = #tpu.dot_dimension_numbers<[1], [0], [0], [1], [0, 0, 1, 1], [], []>} : vector<64x64xbf16>, vector<64x256xbf16>, vector<64x256xf32> -> vector<64x256xf32>
    %c0_4 = arith.constant 0 : index
    %c0_5 = arith.constant 0 : index
    %4 = vector.load %arg4[%c0_4, %c0_5] : memref<1x256xf32, #tpu.memory_space<vmem>>, vector<1x256xf32>
    %5 = vector.broadcast %4 : vector<1x256xf32> to vector<64x256xf32>
    %6 = arith.addf %3, %5 : vector<64x256xf32>
    %c0_6 = arith.constant 0 : index
    %c0_7 = arith.constant 0 : index
    %7 = vector.load %arg8[%c0_6, %c0_7] : memref<64x256xf32, #tpu.memory_space<vmem>>, vector<64x256xf32>
    tpu.vector_store %arg8[%c0_6, %c0_7], %6 {strides = array<i32>} : memref<64x256xf32, #tpu.memory_space<vmem>>, vector<64x256xf32>,
    %c0_8 = arith.constant 0 : index
    %c0_9 = arith.constant 0 : index
    %8 = vector.load %arg3[%c0_8, %c0_9] : memref<64x256xbf16, #tpu.memory_space<vmem>>, vector<64x256xbf16>
    %cst_10 = arith.constant 0.000000e+00 : f32
    %9 = vector.broadcast %cst_10 : f32 to vector<8x64xf32>
    %cst_11 = arith.constant 0.000000e+00 : f32
    %10 = vector.broadcast %cst_11 : f32 to vector<8x64xf32>
    %c0_i32 = arith.constant 0 : i32
    %c8_i32 = arith.constant 8 : i32
    %11 = arith.muli %c0_i32, %c8_i32 : i32
    %12 = tpu.assume_multiple %11, 8 : i32
    %13 = arith.index_cast %12 : i32 to index
    %c0_12 = arith.constant 0 : index
    %14 = vector.load %arg8[%13, %c0_12] : memref<64x256xf32, #tpu.memory_space<vmem>>, vector<8x256xf32>
    %15 = arith.truncf %9 : vector<8x64xf32> to vector<8x64xbf16>
    %cst_13 = arith.constant dense<0.000000e+00> : vector<8x256xf32>
    %16 = tpu.matmul %15, %8, %cst_13 {dimension_numbers = #tpu.dot_dimension_numbers<[1], [0], [0], [1], [0, 0, 1, 1], [], []>} : vector<8x64xbf16>, vector<64x256xbf16>, vector<8x256xf32> -> vector<8x256xf32>
    %17 = arith.addf %14, %16 : vector<8x256xf32>
    %18 = vector.extract_strided_slice %17 {offsets = [0, 0], sizes = [8, 64], strides = [1, 1]} : vector<8x256xf32> to vector<8x64xf32>
    %cst_14 = arith.constant 5.000000e-01 : f32
    %19 = vector.broadcast %cst_14 : f32 to vector<8x64xf32>
    %20 = arith.mulf %19, %18 : vector<8x64xf32>
    %21 = math.tanh %20 : vector<8x64xf32>
    %cst_15 = arith.constant 1.000000e+00 : f32
    %22 = vector.broadcast %cst_15 : f32 to vector<8x64xf32>
    %23 = arith.addf %21, %22 : vector<8x64xf32>
    %cst_16 = arith.constant 5.000000e-01 : f32
    %24 = vector.broadcast %cst_16 : f32 to vector<8x64xf32>
    %25 = arith.mulf %24, %23 : vector<8x64xf32>
    %26 = vector.extract_strided_slice %17 {offsets = [0, 64], sizes = [8, 64], strides = [1, 1]} : vector<8x256xf32> to vector<8x64xf32>
    %cst_17 = arith.constant 5.000000e-01 : f32
    %27 = vector.broadcast %cst_17 : f32 to vector<8x64xf32>
    %28 = arith.mulf %27, %26 : vector<8x64xf32>
    %29 = math.tanh %28 : vector<8x64xf32>
    %cst_18 = arith.constant 1.000000e+00 : f32
    %30 = vector.broadcast %cst_18 : f32 to vector<8x64xf32>
    %31 = arith.addf %29, %30 : vector<8x64xf32>
    %cst_19 = arith.constant 5.000000e-01 : f32
    %32 = vector.broadcast %cst_19 : f32 to vector<8x64xf32>
    %33 = arith.mulf %32, %31 : vector<8x64xf32>
    %34 = vector.extract_strided_slice %17 {offsets = [0, 128], sizes = [8, 64], strides = [1, 1]} : vector<8x256xf32> to vector<8x64xf32>
    %35 = math.tanh %34 : vector<8x64xf32>
    %36 = vector.extract_strided_slice %17 {offsets = [0, 192], sizes = [8, 64], strides = [1, 1]} : vector<8x256xf32> to vector<8x64xf32>
    %cst_20 = arith.constant 5.000000e-01 : f32
    %37 = vector.broadcast %cst_20 : f32 to vector<8x64xf32>
    %38 = arith.mulf %37, %36 : vector<8x64xf32>
    %39 = math.tanh %38 : vector<8x64xf32>
    %cst_21 = arith.constant 1.000000e+00 : f32
    %40 = vector.broadcast %cst_21 : f32 to vector<8x64xf32>
    %41 = arith.addf %39, %40 : vector<8x64xf32>
    %cst_22 = arith.constant 5.000000e-01 : f32
    %42 = vector.broadcast %cst_22 : f32 to vector<8x64xf32>
    %43 = arith.mulf %42, %41 : vector<8x64xf32>
    %44 = arith.mulf %33, %10 : vector<8x64xf32>
    %45 = arith.mulf %25, %35 : vector<8x64xf32>
    %46 = arith.addf %44, %45 : vector<8x64xf32>
    %47 = math.tanh %46 : vector<8x64xf32>
    %48 = arith.mulf %43, %47 : vector<8x64xf32>
    %c1_i32 = arith.constant 1 : i32
    %c8_i32_23 = arith.constant 8 : i32
    %49 = arith.muli %c1_i32, %c8_i32_23 : i32
    %50 = tpu.assume_multiple %49, 8 : i32
    %51 = arith.index_cast %50 : i32 to index
    %c0_24 = arith.constant 0 : index
    %52 = vector.load %arg8[%51, %c0_24] : memref<64x256xf32, #tpu.memory_space<vmem>>, vector<8x256xf32>
    %53 = arith.truncf %48 : vector<8x64xf32> to vector<8x64xbf16>
    %cst_25 = arith.constant dense<0.000000e+00> : vector<8x256xf32>
    %54 = tpu.matmul %53, %8, %cst_25 {dimension_numbers = #tpu.dot_dimension_numbers<[1], [0], [0], [1], [0, 0, 1, 1], [], []>} : vector<8x64xbf16>, vector<64x256xbf16>, vector<8x256xf32> -> vector<8x256xf32>
    %55 = arith.addf %52, %54 : vector<8x256xf32>
    %56 = vector.extract_strided_slice %55 {offsets = [0, 0], sizes = [8, 64], strides = [1, 1]} : vector<8x256xf32> to vector<8x64xf32>
    %cst_26 = arith.constant 5.000000e-01 : f32
    %57 = vector.broadcast %cst_26 : f32 to vector<8x64xf32>
    %58 = arith.mulf %57, %56 : vector<8x64xf32>
    %59 = math.tanh %58 : vector<8x64xf32>
    %cst_27 = arith.constant 1.000000e+00 : f32
    %60 = vector.broadcast %cst_27 : f32 to vector<8x64xf32>
    %61 = arith.addf %59, %60 : vector<8x64xf32>
    %cst_28 = arith.constant 5.000000e-01 : f32
    %62 = vector.broadcast %cst_28 : f32 to vector<8x64xf32>
    %63 = arith.mulf %62, %61 : vector<8x64xf32>
    %64 = vector.extract_strided_slice %55 {offsets = [0, 64], sizes = [8, 64], strides = [1, 1]} : vector<8x256xf32> to vector<8x64xf32>
    %cst_29 = arith.constant 5.000000e-01 : f32
    %65 = vector.broadcast %cst_29 : f32 to vector<8x64xf32>
    %66 = arith.mulf %65, %64 : vector<8x64xf32>
    %67 = math.tanh %66 : vector<8x64xf32>
    %cst_30 = arith.constant 1.000000e+00 : f32
    %68 = vector.broadcast %cst_30 : f32 to vector<8x64xf32>
    %69 = arith.addf %67, %68 : vector<8x64xf32>
    %cst_31 = arith.constant 5.000000e-01 : f32
    %70 = vector.broadcast %cst_31 : f32 to vector<8x64xf32>
    %71 = arith.mulf %70, %69 : vector<8x64xf32>
    %72 = vector.extract_strided_slice %55 {offsets = [0, 128], sizes = [8, 64], strides = [1, 1]} : vector<8x256xf32> to vector<8x64xf32>
    %73 = math.tanh %72 : vector<8x64xf32>
    %74 = vector.extract_strided_slice %55 {offsets = [0, 192], sizes = [8, 64], strides = [1, 1]} : vector<8x256xf32> to vector<8x64xf32>
    %cst_32 = arith.constant 5.000000e-01 : f32
    %75 = vector.broadcast %cst_32 : f32 to vector<8x64xf32>
    %76 = arith.mulf %75, %74 : vector<8x64xf32>
    %77 = math.tanh %76 : vector<8x64xf32>
    %cst_33 = arith.constant 1.000000e+00 : f32
    %78 = vector.broadcast %cst_33 : f32 to vector<8x64xf32>
    %79 = arith.addf %77, %78 : vector<8x64xf32>
    %cst_34 = arith.constant 5.000000e-01 : f32
    %80 = vector.broadcast %cst_34 : f32 to vector<8x64xf32>
    %81 = arith.mulf %80, %79 : vector<8x64xf32>
    %82 = arith.mulf %71, %46 : vector<8x64xf32>
    %83 = arith.mulf %63, %73 : vector<8x64xf32>
    %84 = arith.addf %82, %83 : vector<8x64xf32>
    %85 = math.tanh %84 : vector<8x64xf32>
    %86 = arith.mulf %81, %85 : vector<8x64xf32>
    %c2_i32 = arith.constant 2 : i32
    %c8_i32_35 = arith.constant 8 : i32
    %87 = arith.muli %c2_i32, %c8_i32_35 : i32
    %88 = tpu.assume_multiple %87, 8 : i32
    %89 = arith.index_cast %88 : i32 to index
    %c0_36 = arith.constant 0 : index
    %90 = vector.load %arg8[%89, %c0_36] : memref<64x256xf32, #tpu.memory_space<vmem>>, vector<8x256xf32>
    %91 = arith.truncf %86 : vector<8x64xf32> to vector<8x64xbf16>
    %cst_37 = arith.constant dense<0.000000e+00> : vector<8x256xf32>
    %92 = tpu.matmul %91, %8, %cst_37 {dimension_numbers = #tpu.dot_dimension_numbers<[1], [0], [0], [1], [0, 0, 1, 1], [], []>} : vector<8x64xbf16>, vector<64x256xbf16>, vector<8x256xf32> -> vector<8x256xf32>
    %93 = arith.addf %90, %92 : vector<8x256xf32>
    %94 = vector.extract_strided_slice %93 {offsets = [0, 0], sizes = [8, 64], strides = [1, 1]} : vector<8x256xf32> to vector<8x64xf32>
    %cst_38 = arith.constant 5.000000e-01 : f32
    %95 = vector.broadcast %cst_38 : f32 to vector<8x64xf32>
    %96 = arith.mulf %95, %94 : vector<8x64xf32>
    %97 = math.tanh %96 : vector<8x64xf32>
    %cst_39 = arith.constant 1.000000e+00 : f32
    %98 = vector.broadcast %cst_39 : f32 to vector<8x64xf32>
    %99 = arith.addf %97, %98 : vector<8x64xf32>
    %cst_40 = arith.constant 5.000000e-01 : f32
    %100 = vector.broadcast %cst_40 : f32 to vector<8x64xf32>
    %101 = arith.mulf %100, %99 : vector<8x64xf32>
    %102 = vector.extract_strided_slice %93 {offsets = [0, 64], sizes = [8, 64], strides = [1, 1]} : vector<8x256xf32> to vector<8x64xf32>
    %cst_41 = arith.constant 5.000000e-01 : f32
    %103 = vector.broadcast %cst_41 : f32 to vector<8x64xf32>
    %104 = arith.mulf %103, %102 : vector<8x64xf32>
    %105 = math.tanh %104 : vector<8x64xf32>
    %cst_42 = arith.constant 1.000000e+00 : f32
    %106 = vector.broadcast %cst_42 : f32 to vector<8x64xf32>
    %107 = arith.addf %105, %106 : vector<8x64xf32>
    %cst_43 = arith.constant 5.000000e-01 : f32
    %108 = vector.broadcast %cst_43 : f32 to vector<8x64xf32>
    %109 = arith.mulf %108, %107 : vector<8x64xf32>
    %110 = vector.extract_strided_slice %93 {offsets = [0, 128], sizes = [8, 64], strides = [1, 1]} : vector<8x256xf32> to vector<8x64xf32>
    %111 = math.tanh %110 : vector<8x64xf32>
    %112 = vector.extract_strided_slice %93 {offsets = [0, 192], sizes = [8, 64], strides = [1, 1]} : vector<8x256xf32> to vector<8x64xf32>
    %cst_44 = arith.constant 5.000000e-01 : f32
    %113 = vector.broadcast %cst_44 : f32 to vector<8x64xf32>
    %114 = arith.mulf %113, %112 : vector<8x64xf32>
    %115 = math.tanh %114 : vector<8x64xf32>
    %cst_45 = arith.constant 1.000000e+00 : f32
    %116 = vector.broadcast %cst_45 : f32 to vector<8x64xf32>
    %117 = arith.addf %115, %116 : vector<8x64xf32>
    %cst_46 = arith.constant 5.000000e-01 : f32
    %118 = vector.broadcast %cst_46 : f32 to vector<8x64xf32>
    %119 = arith.mulf %118, %117 : vector<8x64xf32>
    %120 = arith.mulf %109, %84 : vector<8x64xf32>
    %121 = arith.mulf %101, %111 : vector<8x64xf32>
    %122 = arith.addf %120, %121 : vector<8x64xf32>
    %123 = math.tanh %122 : vector<8x64xf32>
    %124 = arith.mulf %119, %123 : vector<8x64xf32>
    %c3_i32 = arith.constant 3 : i32
    %c8_i32_47 = arith.constant 8 : i32
    %125 = arith.muli %c3_i32, %c8_i32_47 : i32
    %126 = tpu.assume_multiple %125, 8 : i32
    %127 = arith.index_cast %126 : i32 to index
    %c0_48 = arith.constant 0 : index
    %128 = vector.load %arg8[%127, %c0_48] : memref<64x256xf32, #tpu.memory_space<vmem>>, vector<8x256xf32>
    %129 = arith.truncf %124 : vector<8x64xf32> to vector<8x64xbf16>
    %cst_49 = arith.constant dense<0.000000e+00> : vector<8x256xf32>
    %130 = tpu.matmul %129, %8, %cst_49 {dimension_numbers = #tpu.dot_dimension_numbers<[1], [0], [0], [1], [0, 0, 1, 1], [], []>} : vector<8x64xbf16>, vector<64x256xbf16>, vector<8x256xf32> -> vector<8x256xf32>
    %131 = arith.addf %128, %130 : vector<8x256xf32>
    %132 = vector.extract_strided_slice %131 {offsets = [0, 0], sizes = [8, 64], strides = [1, 1]} : vector<8x256xf32> to vector<8x64xf32>
    %cst_50 = arith.constant 5.000000e-01 : f32
    %133 = vector.broadcast %cst_50 : f32 to vector<8x64xf32>
    %134 = arith.mulf %133, %132 : vector<8x64xf32>
    %135 = math.tanh %134 : vector<8x64xf32>
    %cst_51 = arith.constant 1.000000e+00 : f32
    %136 = vector.broadcast %cst_51 : f32 to vector<8x64xf32>
    %137 = arith.addf %135, %136 : vector<8x64xf32>
    %cst_52 = arith.constant 5.000000e-01 : f32
    %138 = vector.broadcast %cst_52 : f32 to vector<8x64xf32>
    %139 = arith.mulf %138, %137 : vector<8x64xf32>
    %140 = vector.extract_strided_slice %131 {offsets = [0, 64], sizes = [8, 64], strides = [1, 1]} : vector<8x256xf32> to vector<8x64xf32>
    %cst_53 = arith.constant 5.000000e-01 : f32
    %141 = vector.broadcast %cst_53 : f32 to vector<8x64xf32>
    %142 = arith.mulf %141, %140 : vector<8x64xf32>
    %143 = math.tanh %142 : vector<8x64xf32>
    %cst_54 = arith.constant 1.000000e+00 : f32
    %144 = vector.broadcast %cst_54 : f32 to vector<8x64xf32>
    %145 = arith.addf %143, %144 : vector<8x64xf32>
    %cst_55 = arith.constant 5.000000e-01 : f32
    %146 = vector.broadcast %cst_55 : f32 to vector<8x64xf32>
    %147 = arith.mulf %146, %145 : vector<8x64xf32>
    %148 = vector.extract_strided_slice %131 {offsets = [0, 128], sizes = [8, 64], strides = [1, 1]} : vector<8x256xf32> to vector<8x64xf32>
    %149 = math.tanh %148 : vector<8x64xf32>
    %150 = vector.extract_strided_slice %131 {offsets = [0, 192], sizes = [8, 64], strides = [1, 1]} : vector<8x256xf32> to vector<8x64xf32>
    %cst_56 = arith.constant 5.000000e-01 : f32
    %151 = vector.broadcast %cst_56 : f32 to vector<8x64xf32>
    %152 = arith.mulf %151, %150 : vector<8x64xf32>
    %153 = math.tanh %152 : vector<8x64xf32>
    %cst_57 = arith.constant 1.000000e+00 : f32
    %154 = vector.broadcast %cst_57 : f32 to vector<8x64xf32>
    %155 = arith.addf %153, %154 : vector<8x64xf32>
    %cst_58 = arith.constant 5.000000e-01 : f32
    %156 = vector.broadcast %cst_58 : f32 to vector<8x64xf32>
    %157 = arith.mulf %156, %155 : vector<8x64xf32>
    %158 = arith.mulf %147, %122 : vector<8x64xf32>
    %159 = arith.mulf %139, %149 : vector<8x64xf32>
    %160 = arith.addf %158, %159 : vector<8x64xf32>
    %161 = math.tanh %160 : vector<8x64xf32>
    %162 = arith.mulf %157, %161 : vector<8x64xf32>
    %c4_i32 = arith.constant 4 : i32
    %c8_i32_59 = arith.constant 8 : i32
    %163 = arith.muli %c4_i32, %c8_i32_59 : i32
    %164 = tpu.assume_multiple %163, 8 : i32
    %165 = arith.index_cast %164 : i32 to index
    %c0_60 = arith.constant 0 : index
    %166 = vector.load %arg8[%165, %c0_60] : memref<64x256xf32, #tpu.memory_space<vmem>>, vector<8x256xf32>
    %167 = arith.truncf %162 : vector<8x64xf32> to vector<8x64xbf16>
    %cst_61 = arith.constant dense<0.000000e+00> : vector<8x256xf32>
    %168 = tpu.matmul %167, %8, %cst_61 {dimension_numbers = #tpu.dot_dimension_numbers<[1], [0], [0], [1], [0, 0, 1, 1], [], []>} : vector<8x64xbf16>, vector<64x256xbf16>, vector<8x256xf32> -> vector<8x256xf32>
    %169 = arith.addf %166, %168 : vector<8x256xf32>
    %170 = vector.extract_strided_slice %169 {offsets = [0, 0], sizes = [8, 64], strides = [1, 1]} : vector<8x256xf32> to vector<8x64xf32>
    %cst_62 = arith.constant 5.000000e-01 : f32
    %171 = vector.broadcast %cst_62 : f32 to vector<8x64xf32>
    %172 = arith.mulf %171, %170 : vector<8x64xf32>
    %173 = math.tanh %172 : vector<8x64xf32>
    %cst_63 = arith.constant 1.000000e+00 : f32
    %174 = vector.broadcast %cst_63 : f32 to vector<8x64xf32>
    %175 = arith.addf %173, %174 : vector<8x64xf32>
    %cst_64 = arith.constant 5.000000e-01 : f32
    %176 = vector.broadcast %cst_64 : f32 to vector<8x64xf32>
    %177 = arith.mulf %176, %175 : vector<8x64xf32>
    %178 = vector.extract_strided_slice %169 {offsets = [0, 64], sizes = [8, 64], strides = [1, 1]} : vector<8x256xf32> to vector<8x64xf32>
    %cst_65 = arith.constant 5.000000e-01 : f32
    %179 = vector.broadcast %cst_65 : f32 to vector<8x64xf32>
    %180 = arith.mulf %179, %178 : vector<8x64xf32>
    %181 = math.tanh %180 : vector<8x64xf32>
    %cst_66 = arith.constant 1.000000e+00 : f32
    %182 = vector.broadcast %cst_66 : f32 to vector<8x64xf32>
    %183 = arith.addf %181, %182 : vector<8x64xf32>
    %cst_67 = arith.constant 5.000000e-01 : f32
    %184 = vector.broadcast %cst_67 : f32 to vector<8x64xf32>
    %185 = arith.mulf %184, %183 : vector<8x64xf32>
    %186 = vector.extract_strided_slice %169 {offsets = [0, 128], sizes = [8, 64], strides = [1, 1]} : vector<8x256xf32> to vector<8x64xf32>
    %187 = math.tanh %186 : vector<8x64xf32>
    %188 = vector.extract_strided_slice %169 {offsets = [0, 192], sizes = [8, 64], strides = [1, 1]} : vector<8x256xf32> to vector<8x64xf32>
    %cst_68 = arith.constant 5.000000e-01 : f32
    %189 = vector.broadcast %cst_68 : f32 to vector<8x64xf32>
    %190 = arith.mulf %189, %188 : vector<8x64xf32>
    %191 = math.tanh %190 : vector<8x64xf32>
    %cst_69 = arith.constant 1.000000e+00 : f32
    %192 = vector.broadcast %cst_69 : f32 to vector<8x64xf32>
    %193 = arith.addf %191, %192 : vector<8x64xf32>
    %cst_70 = arith.constant 5.000000e-01 : f32
    %194 = vector.broadcast %cst_70 : f32 to vector<8x64xf32>
    %195 = arith.mulf %194, %193 : vector<8x64xf32>
    %196 = arith.mulf %185, %160 : vector<8x64xf32>
    %197 = arith.mulf %177, %187 : vector<8x64xf32>
    %198 = arith.addf %196, %197 : vector<8x64xf32>
    %199 = math.tanh %198 : vector<8x64xf32>
    %200 = arith.mulf %195, %199 : vector<8x64xf32>
    %c5_i32 = arith.constant 5 : i32
    %c8_i32_71 = arith.constant 8 : i32
    %201 = arith.muli %c5_i32, %c8_i32_71 : i32
    %202 = tpu.assume_multiple %201, 8 : i32
    %203 = arith.index_cast %202 : i32 to index
    %c0_72 = arith.constant 0 : index
    %204 = vector.load %arg8[%203, %c0_72] : memref<64x256xf32, #tpu.memory_space<vmem>>, vector<8x256xf32>
    %205 = arith.truncf %200 : vector<8x64xf32> to vector<8x64xbf16>
    %cst_73 = arith.constant dense<0.000000e+00> : vector<8x256xf32>
    %206 = tpu.matmul %205, %8, %cst_73 {dimension_numbers = #tpu.dot_dimension_numbers<[1], [0], [0], [1], [0, 0, 1, 1], [], []>} : vector<8x64xbf16>, vector<64x256xbf16>, vector<8x256xf32> -> vector<8x256xf32>
    %207 = arith.addf %204, %206 : vector<8x256xf32>
    %208 = vector.extract_strided_slice %207 {offsets = [0, 0], sizes = [8, 64], strides = [1, 1]} : vector<8x256xf32> to vector<8x64xf32>
    %cst_74 = arith.constant 5.000000e-01 : f32
    %209 = vector.broadcast %cst_74 : f32 to vector<8x64xf32>
    %210 = arith.mulf %209, %208 : vector<8x64xf32>
    %211 = math.tanh %210 : vector<8x64xf32>
    %cst_75 = arith.constant 1.000000e+00 : f32
    %212 = vector.broadcast %cst_75 : f32 to vector<8x64xf32>
    %213 = arith.addf %211, %212 : vector<8x64xf32>
    %cst_76 = arith.constant 5.000000e-01 : f32
    %214 = vector.broadcast %cst_76 : f32 to vector<8x64xf32>
    %215 = arith.mulf %214, %213 : vector<8x64xf32>
    %216 = vector.extract_strided_slice %207 {offsets = [0, 64], sizes = [8, 64], strides = [1, 1]} : vector<8x256xf32> to vector<8x64xf32>
    %cst_77 = arith.constant 5.000000e-01 : f32
    %217 = vector.broadcast %cst_77 : f32 to vector<8x64xf32>
    %218 = arith.mulf %217, %216 : vector<8x64xf32>
    %219 = math.tanh %218 : vector<8x64xf32>
    %cst_78 = arith.constant 1.000000e+00 : f32
    %220 = vector.broadcast %cst_78 : f32 to vector<8x64xf32>
    %221 = arith.addf %219, %220 : vector<8x64xf32>
    %cst_79 = arith.constant 5.000000e-01 : f32
    %222 = vector.broadcast %cst_79 : f32 to vector<8x64xf32>
    %223 = arith.mulf %222, %221 : vector<8x64xf32>
    %224 = vector.extract_strided_slice %207 {offsets = [0, 128], sizes = [8, 64], strides = [1, 1]} : vector<8x256xf32> to vector<8x64xf32>
    %225 = math.tanh %224 : vector<8x64xf32>
    %226 = vector.extract_strided_slice %207 {offsets = [0, 192], sizes = [8, 64], strides = [1, 1]} : vector<8x256xf32> to vector<8x64xf32>
    %cst_80 = arith.constant 5.000000e-01 : f32
    %227 = vector.broadcast %cst_80 : f32 to vector<8x64xf32>
    %228 = arith.mulf %227, %226 : vector<8x64xf32>
    %229 = math.tanh %228 : vector<8x64xf32>
    %cst_81 = arith.constant 1.000000e+00 : f32
    %230 = vector.broadcast %cst_81 : f32 to vector<8x64xf32>
    %231 = arith.addf %229, %230 : vector<8x64xf32>
    %cst_82 = arith.constant 5.000000e-01 : f32
    %232 = vector.broadcast %cst_82 : f32 to vector<8x64xf32>
    %233 = arith.mulf %232, %231 : vector<8x64xf32>
    %234 = arith.mulf %223, %198 : vector<8x64xf32>
    %235 = arith.mulf %215, %225 : vector<8x64xf32>
    %236 = arith.addf %234, %235 : vector<8x64xf32>
    %237 = math.tanh %236 : vector<8x64xf32>
    %238 = arith.mulf %233, %237 : vector<8x64xf32>
    %c6_i32 = arith.constant 6 : i32
    %c8_i32_83 = arith.constant 8 : i32
    %239 = arith.muli %c6_i32, %c8_i32_83 : i32
    %240 = tpu.assume_multiple %239, 8 : i32
    %241 = arith.index_cast %240 : i32 to index
    %c0_84 = arith.constant 0 : index
    %242 = vector.load %arg8[%241, %c0_84] : memref<64x256xf32, #tpu.memory_space<vmem>>, vector<8x256xf32>
    %243 = arith.truncf %238 : vector<8x64xf32> to vector<8x64xbf16>
    %cst_85 = arith.constant dense<0.000000e+00> : vector<8x256xf32>
    %244 = tpu.matmul %243, %8, %cst_85 {dimension_numbers = #tpu.dot_dimension_numbers<[1], [0], [0], [1], [0, 0, 1, 1], [], []>} : vector<8x64xbf16>, vector<64x256xbf16>, vector<8x256xf32> -> vector<8x256xf32>
    %245 = arith.addf %242, %244 : vector<8x256xf32>
    %246 = vector.extract_strided_slice %245 {offsets = [0, 0], sizes = [8, 64], strides = [1, 1]} : vector<8x256xf32> to vector<8x64xf32>
    %cst_86 = arith.constant 5.000000e-01 : f32
    %247 = vector.broadcast %cst_86 : f32 to vector<8x64xf32>
    %248 = arith.mulf %247, %246 : vector<8x64xf32>
    %249 = math.tanh %248 : vector<8x64xf32>
    %cst_87 = arith.constant 1.000000e+00 : f32
    %250 = vector.broadcast %cst_87 : f32 to vector<8x64xf32>
    %251 = arith.addf %249, %250 : vector<8x64xf32>
    %cst_88 = arith.constant 5.000000e-01 : f32
    %252 = vector.broadcast %cst_88 : f32 to vector<8x64xf32>
    %253 = arith.mulf %252, %251 : vector<8x64xf32>
    %254 = vector.extract_strided_slice %245 {offsets = [0, 64], sizes = [8, 64], strides = [1, 1]} : vector<8x256xf32> to vector<8x64xf32>
    %cst_89 = arith.constant 5.000000e-01 : f32
    %255 = vector.broadcast %cst_89 : f32 to vector<8x64xf32>
    %256 = arith.mulf %255, %254 : vector<8x64xf32>
    %257 = math.tanh %256 : vector<8x64xf32>
    %cst_90 = arith.constant 1.000000e+00 : f32
    %258 = vector.broadcast %cst_90 : f32 to vector<8x64xf32>
    %259 = arith.addf %257, %258 : vector<8x64xf32>
    %cst_91 = arith.constant 5.000000e-01 : f32
    %260 = vector.broadcast %cst_91 : f32 to vector<8x64xf32>
    %261 = arith.mulf %260, %259 : vector<8x64xf32>
    %262 = vector.extract_strided_slice %245 {offsets = [0, 128], sizes = [8, 64], strides = [1, 1]} : vector<8x256xf32> to vector<8x64xf32>
    %263 = math.tanh %262 : vector<8x64xf32>
    %264 = vector.extract_strided_slice %245 {offsets = [0, 192], sizes = [8, 64], strides = [1, 1]} : vector<8x256xf32> to vector<8x64xf32>
    %cst_92 = arith.constant 5.000000e-01 : f32
    %265 = vector.broadcast %cst_92 : f32 to vector<8x64xf32>
    %266 = arith.mulf %265, %264 : vector<8x64xf32>
    %267 = math.tanh %266 : vector<8x64xf32>
    %cst_93 = arith.constant 1.000000e+00 : f32
    %268 = vector.broadcast %cst_93 : f32 to vector<8x64xf32>
    %269 = arith.addf %267, %268 : vector<8x64xf32>
    %cst_94 = arith.constant 5.000000e-01 : f32
    %270 = vector.broadcast %cst_94 : f32 to vector<8x64xf32>
    %271 = arith.mulf %270, %269 : vector<8x64xf32>
    %272 = arith.mulf %261, %236 : vector<8x64xf32>
    %273 = arith.mulf %253, %263 : vector<8x64xf32>
    %274 = arith.addf %272, %273 : vector<8x64xf32>
    %275 = math.tanh %274 : vector<8x64xf32>
    %276 = arith.mulf %271, %275 : vector<8x64xf32>
    %c7_i32 = arith.constant 7 : i32
    %c8_i32_95 = arith.constant 8 : i32
    %277 = arith.muli %c7_i32, %c8_i32_95 : i32
    %278 = tpu.assume_multiple %277, 8 : i32
    %279 = arith.index_cast %278 : i32 to index
    %c0_96 = arith.constant 0 : index
    %280 = vector.load %arg8[%279, %c0_96] : memref<64x256xf32, #tpu.memory_space<vmem>>, vector<8x256xf32>
    %281 = arith.truncf %276 : vector<8x64xf32> to vector<8x64xbf16>
    %cst_97 = arith.constant dense<0.000000e+00> : vector<8x256xf32>
    %282 = tpu.matmul %281, %8, %cst_97 {dimension_numbers = #tpu.dot_dimension_numbers<[1], [0], [0], [1], [0, 0, 1, 1], [], []>} : vector<8x64xbf16>, vector<64x256xbf16>, vector<8x256xf32> -> vector<8x256xf32>
    %283 = arith.addf %280, %282 : vector<8x256xf32>
    %284 = vector.extract_strided_slice %283 {offsets = [0, 0], sizes = [8, 64], strides = [1, 1]} : vector<8x256xf32> to vector<8x64xf32>
    %cst_98 = arith.constant 5.000000e-01 : f32
    %285 = vector.broadcast %cst_98 : f32 to vector<8x64xf32>
    %286 = arith.mulf %285, %284 : vector<8x64xf32>
    %287 = math.tanh %286 : vector<8x64xf32>
    %cst_99 = arith.constant 1.000000e+00 : f32
    %288 = vector.broadcast %cst_99 : f32 to vector<8x64xf32>
    %289 = arith.addf %287, %288 : vector<8x64xf32>
    %cst_100 = arith.constant 5.000000e-01 : f32
    %290 = vector.broadcast %cst_100 : f32 to vector<8x64xf32>
    %291 = arith.mulf %290, %289 : vector<8x64xf32>
    %292 = vector.extract_strided_slice %283 {offsets = [0, 64], sizes = [8, 64], strides = [1, 1]} : vector<8x256xf32> to vector<8x64xf32>
    %cst_101 = arith.constant 5.000000e-01 : f32
    %293 = vector.broadcast %cst_101 : f32 to vector<8x64xf32>
    %294 = arith.mulf %293, %292 : vector<8x64xf32>
    %295 = math.tanh %294 : vector<8x64xf32>
    %cst_102 = arith.constant 1.000000e+00 : f32
    %296 = vector.broadcast %cst_102 : f32 to vector<8x64xf32>
    %297 = arith.addf %295, %296 : vector<8x64xf32>
    %cst_103 = arith.constant 5.000000e-01 : f32
    %298 = vector.broadcast %cst_103 : f32 to vector<8x64xf32>
    %299 = arith.mulf %298, %297 : vector<8x64xf32>
    %300 = vector.extract_strided_slice %283 {offsets = [0, 128], sizes = [8, 64], strides = [1, 1]} : vector<8x256xf32> to vector<8x64xf32>
    %301 = math.tanh %300 : vector<8x64xf32>
    %302 = vector.extract_strided_slice %283 {offsets = [0, 192], sizes = [8, 64], strides = [1, 1]} : vector<8x256xf32> to vector<8x64xf32>
    %cst_104 = arith.constant 5.000000e-01 : f32
    %303 = vector.broadcast %cst_104 : f32 to vector<8x64xf32>
    %304 = arith.mulf %303, %302 : vector<8x64xf32>
    %305 = math.tanh %304 : vector<8x64xf32>
    %cst_105 = arith.constant 1.000000e+00 : f32
    %306 = vector.broadcast %cst_105 : f32 to vector<8x64xf32>
    %307 = arith.addf %305, %306 : vector<8x64xf32>
    %cst_106 = arith.constant 5.000000e-01 : f32
    %308 = vector.broadcast %cst_106 : f32 to vector<8x64xf32>
    %309 = arith.mulf %308, %307 : vector<8x64xf32>
    %310 = arith.mulf %299, %274 : vector<8x64xf32>
    %311 = arith.mulf %291, %301 : vector<8x64xf32>
    %312 = arith.addf %310, %311 : vector<8x64xf32>
    %313 = math.tanh %312 : vector<8x64xf32>
    %314 = arith.mulf %309, %313 : vector<8x64xf32>
    %c8_i32_107 = arith.constant 8 : i32
    %315 = arith.truncf %314 : vector<8x64xf32> to vector<8x64xbf16>
    %c0_108 = arith.constant 0 : index
    %c0_109 = arith.constant 0 : index
    %316 = vector.load %arg5[%c0_108, %c0_109] : memref<64x128xbf16, #tpu.memory_space<vmem>>, vector<64x128xbf16>
    %cst_110 = arith.constant dense<0.000000e+00> : vector<8x128xf32>
    %317 = tpu.matmul %315, %316, %cst_110 {dimension_numbers = #tpu.dot_dimension_numbers<[1], [0], [0], [1], [0, 0, 1, 1], [], []>} : vector<8x64xbf16>, vector<64x128xbf16>, vector<8x128xf32> -> vector<8x128xf32>
    %c0_111 = arith.constant 0 : index
    %c0_112 = arith.constant 0 : index
    %318 = vector.load %arg6[%c0_111, %c0_112] : memref<1x128xf32, #tpu.memory_space<vmem>>, vector<1x128xf32>
    %319 = vector.broadcast %318 : vector<1x128xf32> to vector<8x128xf32>
    %320 = arith.addf %317, %319 : vector<8x128xf32>
    %c0_113 = arith.constant 0 : index
    %c0_114 = arith.constant 0 : index
    %321 = vector.load %arg7[%c0_113, %c0_114] : memref<8x128xf32, #tpu.memory_space<vmem>>, vector<8x128xf32>
    tpu.vector_store %arg7[%c0_113, %c0_114], %320 {strides = array<i32>} : memref<8x128xf32, #tpu.memory_space<vmem>>, vector<8x128xf32>,
    return
  }
  func.func @transform_0(%arg0: i32) -> (i32, i32, i32) {
    %c0_i32 = arith.constant 0 : i32
    %c0_i32_0 = arith.constant 0 : i32
    %c0_i32_1 = arith.constant 0 : i32
    return %arg0, %c0_i32, %c0_i32_0 : i32, i32, i32
  }
  func.func @transform_1(%arg0: i32) -> (i32, i32) {
    %c0_i32 = arith.constant 0 : i32
    %c0_i32_0 = arith.constant 0 : i32
    %c0_i32_1 = arith.constant 0 : i32
    return %c0_i32, %c0_i32_0 : i32, i32
  }
  func.func @transform_2(%arg0: i32) -> (i32, i32) {
    %c0_i32 = arith.constant 0 : i32
    %c0_i32_0 = arith.constant 0 : i32
    %c0_i32_1 = arith.constant 0 : i32
    return %c0_i32, %c0_i32_0 : i32, i32
  }
  func.func @transform_3(%arg0: i32) -> (i32, i32) {
    %c0_i32 = arith.constant 0 : i32
    %c0_i32_0 = arith.constant 0 : i32
    %c0_i32_1 = arith.constant 0 : i32
    return %c0_i32, %c0_i32_0 : i32, i32
  }
  func.func @transform_4(%arg0: i32) -> (i32, i32) {
    %c0_i32 = arith.constant 0 : i32
    %c0_i32_0 = arith.constant 0 : i32
    %c0_i32_1 = arith.constant 0 : i32
    return %c0_i32, %c0_i32_0 : i32, i32
  }
  func.func @transform_5(%arg0: i32) -> (i32, i32) {
    %c0_i32 = arith.constant 0 : i32
    %c0_i32_0 = arith.constant 0 : i32
    %c0_i32_1 = arith.constant 0 : i32
    return %c0_i32, %c0_i32_0 : i32, i32
  }
  func.func @transform_6(%arg0: i32) -> (i32, i32) {
    %c0_i32 = arith.constant 0 : i32
    %c0_i32_0 = arith.constant 0 : i32
    return %arg0, %c0_i32 : i32, i32
  }
}

</mosaic_0001>

<llo_original>
// kernel: rnn_classifier_forward.1
$region0: #{rnn_classifier_forward.1}
  #allocation0 [shape = 'u32[]', space=smem, size = 0x4, offset = 0x4, fixed_abs, tag = 'smem constant byte address 0x4 - core index']
  #allocation1 [shape = 'u32[144,128]{1,0:T(1,128)}', space=vmem, size = 0x12000, scoped, tag = 'internal scratch']
  #allocation2 [shape = 'f32[64,256]{1,0:T(8,128)}', space=vmem, size = 0x10000, scoped, tag = 'scratch operand']
  %s0 = inlined_call_operand.vmem [shape: bf16[1,64,64], index: 0, kind: input, shape index: {}]
  %s1 = inlined_call_operand.vmem [shape: bf16[64,256], index: 1, kind: input, shape index: {}]
  %s2 = inlined_call_operand.vmem [shape: bf16[64,256], index: 2, kind: input, shape index: {}]
  %s3 = inlined_call_operand.vmem [shape: f32[1,256], index: 3, kind: input, shape index: {}]
  %s4 = inlined_call_operand.hbm [shape: bf16[64,128], index: 4, kind: input, shape index: {}]
  %s5 = inlined_call_operand.vmem [shape: f32[1,128], index: 5, kind: input, shape index: {}]
  %s6 = inlined_call_operand.vmem [shape: f32[8,128], index: 6, kind: output, shape index: {}]
  %s7 = sld [smem:[#allocation0]]
  $region38: #{rnn_classifier_forward.1} parent=0
    _
  %s9 = ssub.s32 1, %s7
  %s10 = scalar_select 0, %s9, %s7
  $region1: #{rnn_classifier_forward.1} parent=0
    #allocation3 [shape = 'u8[16384]{0}', space=vmem, size = 0x4000, scoped, tag = 'input window, operand 4, single buffered']
    #allocation4 [shape = 's32[1]{0}', space=sflag, size = 0x4, scoped, tag = 'scoped memory for rnn_classifier_forward.1']
    %11 = vsyncpa [#allocation4], 0
    // Predicated region
    $region2: #{rnn_classifier_forward.1} parent=1 // pred_check
      _
    $region3: #{rnn_classifier_forward.1} parent=1 // pred_check_branch
      %13 = sbr.rel (0) target = $region5
    $region4: #{rnn_classifier_forward.1} parent=1 // pred_region
      _
    $region5: #{rnn_classifier_forward.1} parent=1 // pred_fallthru
      _
    // Predicated region
    $region6: #{rnn_classifier_forward.1} parent=1 // pred_check
      _
    $region7: #{rnn_classifier_forward.1} parent=1 // pred_check_branch
      %15 = sbr.rel (0) target = $region9
    $region8: #{rnn_classifier_forward.1} parent=1 // pred_region
      _
    $region9: #{rnn_classifier_forward.1} parent=1 // pred_fallthru
      _
    // Predicated region
    $region10: #{rnn_classifier_forward.1} parent=1 // pred_check
      _
    $region11: #{rnn_classifier_forward.1} parent=1 // pred_check_branch
      %17 = sbr.rel (0) target = $region13
    $region12: #{rnn_classifier_forward.1} parent=1 // pred_region
      _
    $region13: #{rnn_classifier_forward.1} parent=1 // pred_fallthru
      _
    // Predicated region
    $region14: #{rnn_classifier_forward.1} parent=1 // pred_check
      _
    $region15: #{rnn_classifier_forward.1} parent=1 // pred_check_branch
      %19 = sbr.rel (0) target = $region17
    $region16: #{rnn_classifier_forward.1} parent=1 // pred_region
      _
    $region17: #{rnn_classifier_forward.1} parent=1 // pred_fallthru
      _
    // Predicated region
    $region18: #{rnn_classifier_forward.1} parent=1 // pred_check
      _
    $region19: #{rnn_classifier_forward.1} parent=1 // pred_check_branch
      %21 = sbr.rel (0) target = $region21
    $region20: #{rnn_classifier_forward.1} parent=1 // pred_region
      %s23 = ssub.s32 512, 512
      %24 = vsyncadd [#allocation4], %s23
      %s25 = sshll.u32 [#allocation3], 4
      %s26 = int_to_ptr.vmem [resolvable:$true] %s25
      %31 = dma.hbm_to_vmem [thread:$0]  %s4, 512, %s26, [#allocation4], 64, 64, 4
    $region21: #{rnn_classifier_forward.1} parent=1 // pred_fallthru
      _
    // Predicated region
    $region22: #{rnn_classifier_forward.1} parent=1 // pred_check
      _
    $region23: #{rnn_classifier_forward.1} parent=1 // pred_check_branch
      %33 = sbr.rel (0) target = $region25
    $region24: #{rnn_classifier_forward.1} parent=1 // pred_region
      _
    $region25: #{rnn_classifier_forward.1} parent=1 // pred_fallthru
      _
    // Predicated region
    $region26: #{rnn_classifier_forward.1} parent=1 // pred_check
      _
    $region27: #{rnn_classifier_forward.1} parent=1 // pred_check_branch
      %35 = sbr.rel (0) target = $region29
    $region28: #{rnn_classifier_forward.1} parent=1 // pred_region
      %36 = dma.done [#allocation4], 512
    $region29: #{rnn_classifier_forward.1} parent=1 // pred_fallthru
      _
    %v38 = vld [vmem:[%s0] sm:$0xf]
    %v39 = vld [vmem:[%s0 + $0x4] sm:$0xf]
    %v40 = vld [vmem:[%s0 + $0x8] sm:$0xf]
    %v41 = vld [vmem:[%s0 + $0xc] sm:$0xf]
    %v42 = vld [vmem:[%s0 + $0x10] sm:$0xf]
    %v43 = vld [vmem:[%s0 + $0x14] sm:$0xf]
    %v44 = vld [vmem:[%s0 + $0x18] sm:$0xf]
    %v45 = vld [vmem:[%s0 + $0x1c] sm:$0xf]
    %v46 = vld [vmem:[%s1] sm:$0xff]
    %v47 = vld [vmem:[%s1 + $0x8] sm:$0xff]
    %v48 = vld [vmem:[%s1 + $0x10] sm:$0xff]
    %v49 = vld [vmem:[%s1 + $0x18] sm:$0xff]
    %v50 = vld [vmem:[%s1 + $0x20] sm:$0xff]
    %v51 = vld [vmem:[%s1 + $0x28] sm:$0xff]
    %v52 = vld [vmem:[%s1 + $0x30] sm:$0xff]
    %v53 = vld [vmem:[%s1 + $0x38] sm:$0xff]
    %v54 = vld [vmem:[%s3] sm:$0x3]
    %v56 = vlaneseq
    %v57 = vshrl.u32 %v56, 7
    %v58 = vsub.s32 0, %v57
    %v59 = vrot.slane %v54, %v58
    %v60 = vlaneseq
    %v61 = vshrl.u32 %v60, 7
    %v62 = vsub.s32 1, %v61
    %v63 = vrot.slane %v54, %v62
    %v74 = vunpack.c.l.b16 %v38
    %v75 = vunpack.c.l.b16 %v39
    %v76 = vunpack.c.l.b16 %v40
    %v77 = vunpack.c.l.b16 %v41
    %v78 = vunpack.c.l.b16 %v42
    %v79 = vunpack.c.l.b16 %v43
    %v80 = vunpack.c.l.b16 %v44
    %v81 = vunpack.c.l.b16 %v45
    %v82 = vpack.c.b16 %v75, %v74
    %v83 = vpack.c.b16 %v77, %v76
    %v84 = vpack.c.b16 %v79, %v78
    %v85 = vpack.c.b16 %v81, %v80
    %v94 = vunpack.c.l.b16 %v46
    %v95 = vunpack.c.h.b16 %v46
    %v96 = vunpack.c.l.b16 %v47
    %v97 = vunpack.c.h.b16 %v47
    %v98 = vunpack.c.l.b16 %v48
    %v99 = vunpack.c.h.b16 %v48
    %v100 = vunpack.c.l.b16 %v49
    %v101 = vunpack.c.h.b16 %v49
    %v102 = vunpack.c.l.b16 %v50
    %v103 = vunpack.c.h.b16 %v50
    %v104 = vunpack.c.l.b16 %v51
    %v105 = vunpack.c.h.b16 %v51
    %v106 = vunpack.c.l.b16 %v52
    %v107 = vunpack.c.h.b16 %v52
    %v108 = vunpack.c.l.b16 %v53
    %v109 = vunpack.c.h.b16 %v53
    %v110 = vpack.c.b16 %v96, %v94
    %v111 = vpack.c.b16 %v97, %v95
    %v112 = vpack.c.b16 %v100, %v98
    %v113 = vpack.c.b16 %v101, %v99
    %v114 = vpack.c.b16 %v104, %v102
    %v115 = vpack.c.b16 %v105, %v103
    %v116 = vpack.c.b16 %v108, %v106
    %v117 = vpack.c.b16 %v109, %v107
    %vm126 = vcmask 523264
    %v128 = vsel %vm126, %v82, 0
    %v131 = vsel %vm126, %v83, 0
    %v134 = vsel %vm126, %v84, 0
    %v137 = vsel %vm126, %v85, 0
    %139 = vmatprep.subr.bf16.mxu0 %v111
    %140 = vmatpush1.bf16.msra.mxu0 %v110
    %141 = vmatprep.subr.bf16.mxu0 %v113
    %142 = vmatpush1.bf16.msra.mxu0 %v112
    %143 = vmatprep.subr.bf16.mxu0 %v115
    %144 = vmatpush1.bf16.msra.mxu0 %v114
    %145 = vmatprep.subr.bf16.mxu0 %v117
    %146 = vmatpush1.bf16.msra.mxu0 %v116
    %147 = vmatprep.subr.bf16.mxu0 0
    %148 = vmatpush1.bf16.msra.mxu0 0
    %149 = vmatprep.subr.bf16.mxu0 0
    %150 = vmatpush1.bf16.msra.mxu0 0
    %151 = vmatprep.subr.bf16.mxu0 0
    %152 = vmatpush1.bf16.msra.mxu0 0
    %153 = vmatprep.subr.bf16.mxu0 0
    %154 = vmatpush1.bf16.msra.mxu0 0
    %155 = vmatprep.subr.bf16.mxu0 0
    %156 = vmatpush1.bf16.msra.mxu0 0
    %157 = vmatprep.subr.bf16.mxu0 0
    %158 = vmatpush1.bf16.msra.mxu0 0
    %159 = vmatprep.subr.bf16.mxu0 0
    %160 = vmatpush1.bf16.msra.mxu0 0
    %161 = vmatprep.subr.bf16.mxu0 0
    %162 = vmatpush1.bf16.msra.mxu0 0
    %163 = vmatprep.subr.bf16.mxu0 0
    %164 = vmatpush1.bf16.msra.mxu0 0
    %165 = vmatprep.subr.bf16.mxu0 0
    %166 = vmatpush1.bf16.msra.mxu0 0
    %167 = vmatprep.subr.bf16.mxu0 0
    %168 = vmatpush1.bf16.msra.mxu0 0
    %169 = vmatprep.subr.bf16.mxu0 0
    %170 = vmatpush1.bf16.msra.mxu0 0
    %171 = vmatprep.mubr.bf16.mxu0 0
    %172 = vmatmul.mubr.bf16.gmra.mrb[0].mxu0 %v128
    %v173 = vpop.f32.mrb[0].mxu0
    %v174 = vadd.f32 %v59, %v173
    %v175 = vpop.f32.mrb[0].mxu0
    %v176 = vadd.f32 %v63, %v175
    %v177 = vpop.f32.mrb[0].mxu0
    %v178 = vadd.f32 %v59, %v177
    %v179 = vpop.f32.mrb[0].mxu0
    %v180 = vadd.f32 %v63, %v179
    %181 = vmatprep.mubr.bf16.mxu0 0
    %182 = vmatmul.mubr.bf16.gmra.mrb[0].mxu0 %v131
    %v183 = vpop.f32.mrb[0].mxu0
    %v184 = vadd.f32 %v59, %v183
    %v185 = vpop.f32.mrb[0].mxu0
    %v186 = vadd.f32 %v63, %v185
    %v187 = vpop.f32.mrb[0].mxu0
    %v188 = vadd.f32 %v59, %v187
    %v189 = vpop.f32.mrb[0].mxu0
    %v190 = vadd.f32 %v63, %v189
    %191 = vmatprep.mubr.bf16.mxu0 0
    %192 = vmatmul.mubr.bf16.gmra.mrb[0].mxu0 %v134
    %v193 = vpop.f32.mrb[0].mxu0
    %v194 = vadd.f32 %v59, %v193
    %v195 = vpop.f32.mrb[0].mxu0
    %v196 = vadd.f32 %v63, %v195
    %v197 = vpop.f32.mrb[0].mxu0
    %v198 = vadd.f32 %v59, %v197
    %v199 = vpop.f32.mrb[0].mxu0
    %v200 = vadd.f32 %v63, %v199
    %201 = vmatprep.mubr.bf16.mxu0 0
    %202 = vmatmul.mubr.bf16.gmra.mrb[0].mxu0 %v137
    %v203 = vpop.f32.mrb[0].mxu0
    %v204 = vadd.f32 %v59, %v203
    %v205 = vpop.f32.mrb[0].mxu0
    %v206 = vadd.f32 %v63, %v205
    %v207 = vpop.f32.mrb[0].mxu0
    %v208 = vadd.f32 %v59, %v207
    %v209 = vpop.f32.mrb[0].mxu0
    %v210 = vadd.f32 %v63, %v209
    %211 = vdwg.mxu0
    %212 = vst [vmem:[#allocation2] sm:$0xff] %v174
    %213 = vst [vmem:[#allocation2 + $0x8] sm:$0xff] %v176
    %214 = vst [vmem:[#allocation2 + $0x10] sm:$0xff] %v178
    %215 = vst [vmem:[#allocation2 + $0x18] sm:$0xff] %v180
    %216 = vst [vmem:[#allocation2 + $0x20] sm:$0xff] %v184
    %217 = vst [vmem:[#allocation2 + $0x28] sm:$0xff] %v186
    %218 = vst [vmem:[#allocation2 + $0x30] sm:$0xff] %v188
    %219 = vst [vmem:[#allocation2 + $0x38] sm:$0xff] %v190
    %220 = vst [vmem:[#allocation2 + $0x40] sm:$0xff] %v194
    %221 = vst [vmem:[#allocation2 + $0x48] sm:$0xff] %v196
    %222 = vst [vmem:[#allocation2 + $0x50] sm:$0xff] %v198
    %223 = vst [vmem:[#allocation2 + $0x58] sm:$0xff] %v200
    %224 = vst [vmem:[#allocation2 + $0x60] sm:$0xff] %v204
    %225 = vst [vmem:[#allocation2 + $0x68] sm:$0xff] %v206
    %226 = vst [vmem:[#allocation2 + $0x70] sm:$0xff] %v208
    %227 = vst [vmem:[#allocation2 + $0x78] sm:$0xff] %v210
    %v228 = vld [vmem:[%s2] sm:$0xff]
    %v229 = vld [vmem:[%s2 + $0x8] sm:$0xff]
    %v230 = vld [vmem:[%s2 + $0x10] sm:$0xff]
    %v231 = vld [vmem:[%s2 + $0x18] sm:$0xff]
    %v232 = vld [vmem:[%s2 + $0x20] sm:$0xff]
    %v233 = vld [vmem:[%s2 + $0x28] sm:$0xff]
    %v234 = vld [vmem:[%s2 + $0x30] sm:$0xff]
    %v235 = vld [vmem:[%s2 + $0x38] sm:$0xff]
    %s236 = smul.u32 0, 2
    %s237 = smul.addr %s236, 8
    %s238 = scalar_lea.vmem [#allocation2], %s237
    %v239 = vld [vmem:[%s238] sm:$0xff]
    %v240 = vld [vmem:[%s238 + $0x8] sm:$0xff]
    %v249 = vunpack.c.l.b16 %v228
    %v250 = vunpack.c.h.b16 %v228
    %v251 = vunpack.c.l.b16 %v229
    %v252 = vunpack.c.h.b16 %v229
    %v253 = vunpack.c.l.b16 %v230
    %v254 = vunpack.c.h.b16 %v230
    %v255 = vunpack.c.l.b16 %v231
    %v256 = vunpack.c.h.b16 %v231
    %v257 = vunpack.c.l.b16 %v232
    %v258 = vunpack.c.h.b16 %v232
    %v259 = vunpack.c.l.b16 %v233
    %v260 = vunpack.c.h.b16 %v233
    %v261 = vunpack.c.l.b16 %v234
    %v262 = vunpack.c.h.b16 %v234
    %v263 = vunpack.c.l.b16 %v235
    %v264 = vunpack.c.h.b16 %v235
    %v265 = vpack.c.b16 %v251, %v249
    %v266 = vpack.c.b16 %v252, %v250
    %v267 = vpack.c.b16 %v255, %v253
    %v268 = vpack.c.b16 %v256, %v254
    %v269 = vpack.c.b16 %v259, %v257
    %v270 = vpack.c.b16 %v260, %v258
    %v271 = vpack.c.b16 %v263, %v261
    %v272 = vpack.c.b16 %v264, %v262
    %v282 = vsel %vm126, 0, 0
    %284 = vmatprep.subr.bf16.mxu0 %v266
    %285 = vmatpush1.bf16.msra.mxu0 %v265
    %286 = vmatprep.subr.bf16.mxu0 %v268
    %287 = vmatpush1.bf16.msra.mxu0 %v267
    %288 = vmatprep.subr.bf16.mxu0 %v270
    %289 = vmatpush1.bf16.msra.mxu0 %v269
    %290 = vmatprep.subr.bf16.mxu0 %v272
    %291 = vmatpush1.bf16.msra.mxu0 %v271
    %292 = vmatprep.subr.bf16.mxu0 0
    %293 = vmatpush1.bf16.msra.mxu0 0
    %294 = vmatprep.subr.bf16.mxu0 0
    %295 = vmatpush1.bf16.msra.mxu0 0
    %296 = vmatprep.subr.bf16.mxu0 0
    %297 = vmatpush1.bf16.msra.mxu0 0
    %298 = vmatprep.subr.bf16.mxu0 0
    %299 = vmatpush1.bf16.msra.mxu0 0
    %300 = vmatprep.subr.bf16.mxu0 0
    %301 = vmatpush1.bf16.msra.mxu0 0
    %302 = vmatprep.subr.bf16.mxu0 0
    %303 = vmatpush1.bf16.msra.mxu0 0
    %304 = vmatprep.subr.bf16.mxu0 0
    %305 = vmatpush1.bf16.msra.mxu0 0
    %306 = vmatprep.subr.bf16.mxu0 0
    %307 = vmatpush1.bf16.msra.mxu0 0
    %308 = vmatprep.subr.bf16.mxu0 0
    %309 = vmatpush1.bf16.msra.mxu0 0
    %310 = vmatprep.subr.bf16.mxu0 0
    %311 = vmatpush1.bf16.msra.mxu0 0
    %312 = vmatprep.subr.bf16.mxu0 0
    %313 = vmatpush1.bf16.msra.mxu0 0
    %314 = vmatprep.subr.bf16.mxu0 0
    %315 = vmatpush1.bf16.msra.mxu0 0
    %316 = vmatprep.mubr.bf16.mxu0 0
    %317 = vmatmul.mubr.bf16.gmra.mrb[0].mxu0 %v282
    %v318 = vpop.f32.mrb[0].mxu0
    %v319 = vadd.f32 0.0, %v318
    %v320 = vpop.f32.mrb[0].mxu0
    %v321 = vadd.f32 0.0, %v320
    %v322 = vpop.f32.mrb[0].mxu0
    %v323 = vpop.f32.mrb[0].mxu0
    %324 = vdwg.mxu0
    %v325 = vadd.f32 %v239, %v319
    %v326 = vadd.f32 %v240, %v321
    %v327 = vmul.f32 %v325, 0.5
    %v328 = vtanh.pop %v327
    %v329 = vadd.f32 %v328, 1.0
    %v330 = vmul.f32 %v329, 0.5
    %v331 = vtanh.pop %v326
    %v332 = vmul.f32 %v326, 0.5
    %v333 = vtanh.pop %v332
    %v334 = vadd.f32 %v333, 1.0
    %v335 = vmul.f32 %v334, 0.5
    %v336 = vmul.f32 %v330, 0.0
    %v337 = vmul.f32 %v330, %v331
    %339 = vrot.lane.b32.xlu0 %v337, 64
    %v340 = vpop.permute.xlu0 %339
    %v342 = vadd.f32 %v336, %v340
    %v343 = vtanh.pop %v342
    %v344 = vmul.f32 %v335, %v343
    %s345 = smul.u32 1, 2
    %s346 = smul.addr %s345, 8
    %s347 = scalar_lea.vmem [#allocation2], %s346
    %v348 = vld [vmem:[%s347] sm:$0xff]
    %v349 = vld [vmem:[%s347 + $0x8] sm:$0xff]
    %v350 = vpack.c.bf16 %v344, %v344
    %352 = vrot.lane.b32.xlu0 %v350, 64
    %v353 = vpop.permute.xlu0 %352
    %v355 = vsel %vm126, %v353, 0
    %357 = vmatprep.subr.bf16.mxu0 %v266
    %358 = vmatpush1.bf16.msra.mxu0 %v265
    %359 = vmatprep.subr.bf16.mxu0 %v268
    %360 = vmatpush1.bf16.msra.mxu0 %v267
    %361 = vmatprep.subr.bf16.mxu0 %v270
    %362 = vmatpush1.bf16.msra.mxu0 %v269
    %363 = vmatprep.subr.bf16.mxu0 %v272
    %364 = vmatpush1.bf16.msra.mxu0 %v271
    %365 = vmatprep.subr.bf16.mxu0 0
    %366 = vmatpush1.bf16.msra.mxu0 0
    %367 = vmatprep.subr.bf16.mxu0 0
    %368 = vmatpush1.bf16.msra.mxu0 0
    %369 = vmatprep.subr.bf16.mxu0 0
    %370 = vmatpush1.bf16.msra.mxu0 0
    %371 = vmatprep.subr.bf16.mxu0 0
    %372 = vmatpush1.bf16.msra.mxu0 0
    %373 = vmatprep.subr.bf16.mxu0 0
    %374 = vmatpush1.bf16.msra.mxu0 0
    %375 = vmatprep.subr.bf16.mxu0 0
    %376 = vmatpush1.bf16.msra.mxu0 0
    %377 = vmatprep.subr.bf16.mxu0 0
    %378 = vmatpush1.bf16.msra.mxu0 0
    %379 = vmatprep.subr.bf16.mxu0 0
    %380 = vmatpush1.bf16.msra.mxu0 0
    %381 = vmatprep.subr.bf16.mxu0 0
    %382 = vmatpush1.bf16.msra.mxu0 0
    %383 = vmatprep.subr.bf16.mxu0 0
    %384 = vmatpush1.bf16.msra.mxu0 0
    %385 = vmatprep.subr.bf16.mxu0 0
    %386 = vmatpush1.bf16.msra.mxu0 0
    %387 = vmatprep.subr.bf16.mxu0 0
    %388 = vmatpush1.bf16.msra.mxu0 0
    %389 = vmatprep.mubr.bf16.mxu0 0
    %390 = vmatmul.mubr.bf16.gmra.mrb[0].mxu0 %v355
    %v391 = vpop.f32.mrb[0].mxu0
    %v392 = vadd.f32 0.0, %v391
    %v393 = vpop.f32.mrb[0].mxu0
    %v394 = vadd.f32 0.0, %v393
    %v395 = vpop.f32.mrb[0].mxu0
    %v396 = vpop.f32.mrb[0].mxu0
    %397 = vdwg.mxu0
    %v398 = vadd.f32 %v348, %v392
    %v399 = vadd.f32 %v349, %v394
    %v400 = vmul.f32 %v398, 0.5
    %v401 = vtanh.pop %v400
    %v402 = vadd.f32 %v401, 1.0
    %v403 = vmul.f32 %v402, 0.5
    %v404 = vtanh.pop %v399
    %v405 = vmul.f32 %v399, 0.5
    %v406 = vtanh.pop %v405
    %v407 = vadd.f32 %v406, 1.0
    %v408 = vmul.f32 %v407, 0.5
    %v409 = vmul.f32 %v403, %v342
    %v410 = vmul.f32 %v403, %v404
    %412 = vrot.lane.b32.xlu0 %v410, 64
    %v413 = vpop.permute.xlu0 %412
    %v415 = vadd.f32 %v409, %v413
    %v416 = vtanh.pop %v415
    %v417 = vmul.f32 %v408, %v416
    %s418 = smul.u32 2, 2
    %s419 = smul.addr %s418, 8
    %s420 = scalar_lea.vmem [#allocation2], %s419
    %v421 = vld [vmem:[%s420] sm:$0xff]
    %v422 = vld [vmem:[%s420 + $0x8] sm:$0xff]
    %v423 = vpack.c.bf16 %v417, %v417
    %425 = vrot.lane.b32.xlu0 %v423, 64
    %v426 = vpop.permute.xlu0 %425
    %v428 = vsel %vm126, %v426, 0
    %430 = vmatprep.subr.bf16.mxu0 %v266
    %431 = vmatpush1.bf16.msra.mxu0 %v265
    %432 = vmatprep.subr.bf16.mxu0 %v268
    %433 = vmatpush1.bf16.msra.mxu0 %v267
    %434 = vmatprep.subr.bf16.mxu0 %v270
    %435 = vmatpush1.bf16.msra.mxu0 %v269
    %436 = vmatprep.subr.bf16.mxu0 %v272
    %437 = vmatpush1.bf16.msra.mxu0 %v271
    %438 = vmatprep.subr.bf16.mxu0 0
    %439 = vmatpush1.bf16.msra.mxu0 0
    %440 = vmatprep.subr.bf16.mxu0 0
    %441 = vmatpush1.bf16.msra.mxu0 0
    %442 = vmatprep.subr.bf16.mxu0 0
    %443 = vmatpush1.bf16.msra.mxu0 0
    %444 = vmatprep.subr.bf16.mxu0 0
    %445 = vmatpush1.bf16.msra.mxu0 0
    %446 = vmatprep.subr.bf16.mxu0 0
    %447 = vmatpush1.bf16.msra.mxu0 0
    %448 = vmatprep.subr.bf16.mxu0 0
    %449 = vmatpush1.bf16.msra.mxu0 0
    %450 = vmatprep.subr.bf16.mxu0 0
    %451 = vmatpush1.bf16.msra.mxu0 0
    %452 = vmatprep.subr.bf16.mxu0 0
    %453 = vmatpush1.bf16.msra.mxu0 0
    %454 = vmatprep.subr.bf16.mxu0 0
    %455 = vmatpush1.bf16.msra.mxu0 0
    %456 = vmatprep.subr.bf16.mxu0 0
    %457 = vmatpush1.bf16.msra.mxu0 0
    %458 = vmatprep.subr.bf16.mxu0 0
    %459 = vmatpush1.bf16.msra.mxu0 0
    %460 = vmatprep.subr.bf16.mxu0 0
    %461 = vmatpush1.bf16.msra.mxu0 0
    %462 = vmatprep.mubr.bf16.mxu0 0
    %463 = vmatmul.mubr.bf16.gmra.mrb[0].mxu0 %v428
    %v464 = vpop.f32.mrb[0].mxu0
    %v465 = vadd.f32 0.0, %v464
    %v466 = vpop.f32.mrb[0].mxu0
    %v467 = vadd.f32 0.0, %v466
    %v468 = vpop.f32.mrb[0].mxu0
    %v469 = vpop.f32.mrb[0].mxu0
    %470 = vdwg.mxu0
    %v471 = vadd.f32 %v421, %v465
    %v472 = vadd.f32 %v422, %v467
    %v473 = vmul.f32 %v471, 0.5
    %v474 = vtanh.pop %v473
    %v475 = vadd.f32 %v474, 1.0
    %v476 = vmul.f32 %v475, 0.5
    %v477 = vtanh.pop %v472
    %v478 = vmul.f32 %v472, 0.5
    %v479 = vtanh.pop %v478
    %v480 = vadd.f32 %v479, 1.0
    %v481 = vmul.f32 %v480, 0.5
    %v482 = vmul.f32 %v476, %v415
    %v483 = vmul.f32 %v476, %v477
    %485 = vrot.lane.b32.xlu0 %v483, 64
    %v486 = vpop.permute.xlu0 %485
    %v488 = vadd.f32 %v482, %v486
    %v489 = vtanh.pop %v488
    %v490 = vmul.f32 %v481, %v489
    %s491 = smul.u32 3, 2
    %s492 = smul.addr %s491, 8
    %s493 = scalar_lea.vmem [#allocation2], %s492
    %v494 = vld [vmem:[%s493] sm:$0xff]
    %v495 = vld [vmem:[%s493 + $0x8] sm:$0xff]
    %v496 = vpack.c.bf16 %v490, %v490
    %498 = vrot.lane.b32.xlu0 %v496, 64
    %v499 = vpop.permute.xlu0 %498
    %v501 = vsel %vm126, %v499, 0
    %503 = vmatprep.subr.bf16.mxu0 %v266
    %504 = vmatpush1.bf16.msra.mxu0 %v265
    %505 = vmatprep.subr.bf16.mxu0 %v268
    %506 = vmatpush1.bf16.msra.mxu0 %v267
    %507 = vmatprep.subr.bf16.mxu0 %v270
    %508 = vmatpush1.bf16.msra.mxu0 %v269
    %509 = vmatprep.subr.bf16.mxu0 %v272
    %510 = vmatpush1.bf16.msra.mxu0 %v271
    %511 = vmatprep.subr.bf16.mxu0 0
    %512 = vmatpush1.bf16.msra.mxu0 0
    %513 = vmatprep.subr.bf16.mxu0 0
    %514 = vmatpush1.bf16.msra.mxu0 0
    %515 = vmatprep.subr.bf16.mxu0 0
    %516 = vmatpush1.bf16.msra.mxu0 0
    %517 = vmatprep.subr.bf16.mxu0 0
    %518 = vmatpush1.bf16.msra.mxu0 0
    %519 = vmatprep.subr.bf16.mxu0 0
    %520 = vmatpush1.bf16.msra.mxu0 0
    %521 = vmatprep.subr.bf16.mxu0 0
    %522 = vmatpush1.bf16.msra.mxu0 0
    %523 = vmatprep.subr.bf16.mxu0 0
    %524 = vmatpush1.bf16.msra.mxu0 0
    %525 = vmatprep.subr.bf16.mxu0 0
    %526 = vmatpush1.bf16.msra.mxu0 0
    %527 = vmatprep.subr.bf16.mxu0 0
    %528 = vmatpush1.bf16.msra.mxu0 0
    %529 = vmatprep.subr.bf16.mxu0 0
    %530 = vmatpush1.bf16.msra.mxu0 0
    %531 = vmatprep.subr.bf16.mxu0 0
    %532 = vmatpush1.bf16.msra.mxu0 0
    %533 = vmatprep.subr.bf16.mxu0 0
    %534 = vmatpush1.bf16.msra.mxu0 0
    %535 = vmatprep.mubr.bf16.mxu0 0
    %536 = vmatmul.mubr.bf16.gmra.mrb[0].mxu0 %v501
    %v537 = vpop.f32.mrb[0].mxu0
    %v538 = vadd.f32 0.0, %v537
    %v539 = vpop.f32.mrb[0].mxu0
    %v540 = vadd.f32 0.0, %v539
    %v541 = vpop.f32.mrb[0].mxu0
    %v542 = vpop.f32.mrb[0].mxu0
    %543 = vdwg.mxu0
    %v544 = vadd.f32 %v494, %v538
    %v545 = vadd.f32 %v495, %v540
    %v546 = vmul.f32 %v544, 0.5
    %v547 = vtanh.pop %v546
    %v548 = vadd.f32 %v547, 1.0
    %v549 = vmul.f32 %v548, 0.5
    %v550 = vtanh.pop %v545
    %v551 = vmul.f32 %v545, 0.5
    %v552 = vtanh.pop %v551
    %v553 = vadd.f32 %v552, 1.0
    %v554 = vmul.f32 %v553, 0.5
    %v555 = vmul.f32 %v549, %v488
    %v556 = vmul.f32 %v549, %v550
    %558 = vrot.lane.b32.xlu0 %v556, 64
    %v559 = vpop.permute.xlu0 %558
    %v561 = vadd.f32 %v555, %v559
    %v562 = vtanh.pop %v561
    %v563 = vmul.f32 %v554, %v562
    %s564 = smul.u32 4, 2
    %s565 = smul.addr %s564, 8
    %s566 = scalar_lea.vmem [#allocation2], %s565
    %v567 = vld [vmem:[%s566] sm:$0xff]
    %v568 = vld [vmem:[%s566 + $0x8] sm:$0xff]
    %v569 = vpack.c.bf16 %v563, %v563
    %571 = vrot.lane.b32.xlu0 %v569, 64
    %v572 = vpop.permute.xlu0 %571
    %v574 = vsel %vm126, %v572, 0
    %576 = vmatprep.subr.bf16.mxu0 %v266
    %577 = vmatpush1.bf16.msra.mxu0 %v265
    %578 = vmatprep.subr.bf16.mxu0 %v268
    %579 = vmatpush1.bf16.msra.mxu0 %v267
    %580 = vmatprep.subr.bf16.mxu0 %v270
    %581 = vmatpush1.bf16.msra.mxu0 %v269
    %582 = vmatprep.subr.bf16.mxu0 %v272
    %583 = vmatpush1.bf16.msra.mxu0 %v271
    %584 = vmatprep.subr.bf16.mxu0 0
    %585 = vmatpush1.bf16.msra.mxu0 0
    %586 = vmatprep.subr.bf16.mxu0 0
    %587 = vmatpush1.bf16.msra.mxu0 0
    %588 = vmatprep.subr.bf16.mxu0 0
    %589 = vmatpush1.bf16.msra.mxu0 0
    %590 = vmatprep.subr.bf16.mxu0 0
    %591 = vmatpush1.bf16.msra.mxu0 0
    %592 = vmatprep.subr.bf16.mxu0 0
    %593 = vmatpush1.bf16.msra.mxu0 0
    %594 = vmatprep.subr.bf16.mxu0 0
    %595 = vmatpush1.bf16.msra.mxu0 0
    %596 = vmatprep.subr.bf16.mxu0 0
    %597 = vmatpush1.bf16.msra.mxu0 0
    %598 = vmatprep.subr.bf16.mxu0 0
    %599 = vmatpush1.bf16.msra.mxu0 0
    %600 = vmatprep.subr.bf16.mxu0 0
    %601 = vmatpush1.bf16.msra.mxu0 0
    %602 = vmatprep.subr.bf16.mxu0 0
    %603 = vmatpush1.bf16.msra.mxu0 0
    %604 = vmatprep.subr.bf16.mxu0 0
    %605 = vmatpush1.bf16.msra.mxu0 0
    %606 = vmatprep.subr.bf16.mxu0 0
    %607 = vmatpush1.bf16.msra.mxu0 0
    %608 = vmatprep.mubr.bf16.mxu0 0
    %609 = vmatmul.mubr.bf16.gmra.mrb[0].mxu0 %v574
    %v610 = vpop.f32.mrb[0].mxu0
    %v611 = vadd.f32 0.0, %v610
    %v612 = vpop.f32.mrb[0].mxu0
    %v613 = vadd.f32 0.0, %v612
    %v614 = vpop.f32.mrb[0].mxu0
    %v615 = vpop.f32.mrb[0].mxu0
    %616 = vdwg.mxu0
    %v617 = vadd.f32 %v567, %v611
    %v618 = vadd.f32 %v568, %v613
    %v619 = vmul.f32 %v617, 0.5
    %v620 = vtanh.pop %v619
    %v621 = vadd.f32 %v620, 1.0
    %v622 = vmul.f32 %v621, 0.5
    %v623 = vtanh.pop %v618
    %v624 = vmul.f32 %v618, 0.5
    %v625 = vtanh.pop %v624
    %v626 = vadd.f32 %v625, 1.0
    %v627 = vmul.f32 %v626, 0.5
    %v628 = vmul.f32 %v622, %v561
    %v629 = vmul.f32 %v622, %v623
    %631 = vrot.lane.b32.xlu0 %v629, 64
    %v632 = vpop.permute.xlu0 %631
    %v634 = vadd.f32 %v628, %v632
    %v635 = vtanh.pop %v634
    %v636 = vmul.f32 %v627, %v635
    %s637 = smul.u32 5, 2
    %s638 = smul.addr %s637, 8
    %s639 = scalar_lea.vmem [#allocation2], %s638
    %v640 = vld [vmem:[%s639] sm:$0xff]
    %v641 = vld [vmem:[%s639 + $0x8] sm:$0xff]
    %v642 = vpack.c.bf16 %v636, %v636
    %644 = vrot.lane.b32.xlu0 %v642, 64
    %v645 = vpop.permute.xlu0 %644
    %v647 = vsel %vm126, %v645, 0
    %649 = vmatprep.subr.bf16.mxu0 %v266
    %650 = vmatpush1.bf16.msra.mxu0 %v265
    %651 = vmatprep.subr.bf16.mxu0 %v268
    %652 = vmatpush1.bf16.msra.mxu0 %v267
    %653 = vmatprep.subr.bf16.mxu0 %v270
    %654 = vmatpush1.bf16.msra.mxu0 %v269
    %655 = vmatprep.subr.bf16.mxu0 %v272
    %656 = vmatpush1.bf16.msra.mxu0 %v271
    %657 = vmatprep.subr.bf16.mxu0 0
    %658 = vmatpush1.bf16.msra.mxu0 0
    %659 = vmatprep.subr.bf16.mxu0 0
    %660 = vmatpush1.bf16.msra.mxu0 0
    %661 = vmatprep.subr.bf16.mxu0 0
    %662 = vmatpush1.bf16.msra.mxu0 0
    %663 = vmatprep.subr.bf16.mxu0 0
    %664 = vmatpush1.bf16.msra.mxu0 0
    %665 = vmatprep.subr.bf16.mxu0 0
    %666 = vmatpush1.bf16.msra.mxu0 0
    %667 = vmatprep.subr.bf16.mxu0 0
    %668 = vmatpush1.bf16.msra.mxu0 0
    %669 = vmatprep.subr.bf16.mxu0 0
    %670 = vmatpush1.bf16.msra.mxu0 0
    %671 = vmatprep.subr.bf16.mxu0 0
    %672 = vmatpush1.bf16.msra.mxu0 0
    %673 = vmatprep.subr.bf16.mxu0 0
    %674 = vmatpush1.bf16.msra.mxu0 0
    %675 = vmatprep.subr.bf16.mxu0 0
    %676 = vmatpush1.bf16.msra.mxu0 0
    %677 = vmatprep.subr.bf16.mxu0 0
    %678 = vmatpush1.bf16.msra.mxu0 0
    %679 = vmatprep.subr.bf16.mxu0 0
    %680 = vmatpush1.bf16.msra.mxu0 0
    %681 = vmatprep.mubr.bf16.mxu0 0
    %682 = vmatmul.mubr.bf16.gmra.mrb[0].mxu0 %v647
    %v683 = vpop.f32.mrb[0].mxu0
    %v684 = vadd.f32 0.0, %v683
    %v685 = vpop.f32.mrb[0].mxu0
    %v686 = vadd.f32 0.0, %v685
    %v687 = vpop.f32.mrb[0].mxu0
    %v688 = vpop.f32.mrb[0].mxu0
    %689 = vdwg.mxu0
    %v690 = vadd.f32 %v640, %v684
    %v691 = vadd.f32 %v641, %v686
    %v692 = vmul.f32 %v690, 0.5
    %v693 = vtanh.pop %v692
    %v694 = vadd.f32 %v693, 1.0
    %v695 = vmul.f32 %v694, 0.5
    %v696 = vtanh.pop %v691
    %v697 = vmul.f32 %v691, 0.5
    %v698 = vtanh.pop %v697
    %v699 = vadd.f32 %v698, 1.0
    %v700 = vmul.f32 %v699, 0.5
    %v701 = vmul.f32 %v695, %v634
    %v702 = vmul.f32 %v695, %v696
    %704 = vrot.lane.b32.xlu0 %v702, 64
    %v705 = vpop.permute.xlu0 %704
    %v707 = vadd.f32 %v701, %v705
    %v708 = vtanh.pop %v707
    %v709 = vmul.f32 %v700, %v708
    %s710 = smul.u32 6, 2
    %s711 = smul.addr %s710, 8
    %s712 = scalar_lea.vmem [#allocation2], %s711
    %v713 = vld [vmem:[%s712] sm:$0xff]
    %v714 = vld [vmem:[%s712 + $0x8] sm:$0xff]
    %v715 = vpack.c.bf16 %v709, %v709
    %717 = vrot.lane.b32.xlu0 %v715, 64
    %v718 = vpop.permute.xlu0 %717
    %v720 = vsel %vm126, %v718, 0
    %722 = vmatprep.subr.bf16.mxu0 %v266
    %723 = vmatpush1.bf16.msra.mxu0 %v265
    %724 = vmatprep.subr.bf16.mxu0 %v268
    %725 = vmatpush1.bf16.msra.mxu0 %v267
    %726 = vmatprep.subr.bf16.mxu0 %v270
    %727 = vmatpush1.bf16.msra.mxu0 %v269
    %728 = vmatprep.subr.bf16.mxu0 %v272
    %729 = vmatpush1.bf16.msra.mxu0 %v271
    %730 = vmatprep.subr.bf16.mxu0 0
    %731 = vmatpush1.bf16.msra.mxu0 0
    %732 = vmatprep.subr.bf16.mxu0 0
    %733 = vmatpush1.bf16.msra.mxu0 0
    %734 = vmatprep.subr.bf16.mxu0 0
    %735 = vmatpush1.bf16.msra.mxu0 0
    %736 = vmatprep.subr.bf16.mxu0 0
    %737 = vmatpush1.bf16.msra.mxu0 0
    %738 = vmatprep.subr.bf16.mxu0 0
    %739 = vmatpush1.bf16.msra.mxu0 0
    %740 = vmatprep.subr.bf16.mxu0 0
    %741 = vmatpush1.bf16.msra.mxu0 0
    %742 = vmatprep.subr.bf16.mxu0 0
    %743 = vmatpush1.bf16.msra.mxu0 0
    %744 = vmatprep.subr.bf16.mxu0 0
    %745 = vmatpush1.bf16.msra.mxu0 0
    %746 = vmatprep.subr.bf16.mxu0 0
    %747 = vmatpush1.bf16.msra.mxu0 0
    %748 = vmatprep.subr.bf16.mxu0 0
    %749 = vmatpush1.bf16.msra.mxu0 0
    %750 = vmatprep.subr.bf16.mxu0 0
    %751 = vmatpush1.bf16.msra.mxu0 0
    %752 = vmatprep.subr.bf16.mxu0 0
    %753 = vmatpush1.bf16.msra.mxu0 0
    %754 = vmatprep.mubr.bf16.mxu0 0
    %755 = vmatmul.mubr.bf16.gmra.mrb[0].mxu0 %v720
    %v756 = vpop.f32.mrb[0].mxu0
    %v757 = vadd.f32 0.0, %v756
    %v758 = vpop.f32.mrb[0].mxu0
    %v759 = vadd.f32 0.0, %v758
    %v760 = vpop.f32.mrb[0].mxu0
    %v761 = vpop.f32.mrb[0].mxu0
    %762 = vdwg.mxu0
    %v763 = vadd.f32 %v713, %v757
    %v764 = vadd.f32 %v714, %v759
    %v765 = vmul.f32 %v763, 0.5
    %v766 = vtanh.pop %v765
    %v767 = vadd.f32 %v766, 1.0
    %v768 = vmul.f32 %v767, 0.5
    %v769 = vtanh.pop %v764
    %v770 = vmul.f32 %v764, 0.5
    %v771 = vtanh.pop %v770
    %v772 = vadd.f32 %v771, 1.0
    %v773 = vmul.f32 %v772, 0.5
    %v774 = vmul.f32 %v768, %v707
    %v775 = vmul.f32 %v768, %v769
    %777 = vrot.lane.b32.xlu0 %v775, 64
    %v778 = vpop.permute.xlu0 %777
    %v780 = vadd.f32 %v774, %v778
    %v781 = vtanh.pop %v780
    %v782 = vmul.f32 %v773, %v781
    %s783 = smul.u32 7, 2
    %s784 = smul.addr %s783, 8
    %s785 = scalar_lea.vmem [#allocation2], %s784
    %v786 = vld [vmem:[%s785] sm:$0xff]
    %v787 = vld [vmem:[%s785 + $0x8] sm:$0xff]
    %v788 = vpack.c.bf16 %v782, %v782
    %790 = vrot.lane.b32.xlu0 %v788, 64
    %v791 = vpop.permute.xlu0 %790
    %v793 = vsel %vm126, %v791, 0
    %795 = vmatprep.subr.bf16.mxu0 %v266
    %796 = vmatpush1.bf16.msra.mxu0 %v265
    %797 = vmatprep.subr.bf16.mxu0 %v268
    %798 = vmatpush1.bf16.msra.mxu0 %v267
    %799 = vmatprep.subr.bf16.mxu0 %v270
    %800 = vmatpush1.bf16.msra.mxu0 %v269
    %801 = vmatprep.subr.bf16.mxu0 %v272
    %802 = vmatpush1.bf16.msra.mxu0 %v271
    %803 = vmatprep.subr.bf16.mxu0 0
    %804 = vmatpush1.bf16.msra.mxu0 0
    %805 = vmatprep.subr.bf16.mxu0 0
    %806 = vmatpush1.bf16.msra.mxu0 0
    %807 = vmatprep.subr.bf16.mxu0 0
    %808 = vmatpush1.bf16.msra.mxu0 0
    %809 = vmatprep.subr.bf16.mxu0 0
    %810 = vmatpush1.bf16.msra.mxu0 0
    %811 = vmatprep.subr.bf16.mxu0 0
    %812 = vmatpush1.bf16.msra.mxu0 0
    %813 = vmatprep.subr.bf16.mxu0 0
    %814 = vmatpush1.bf16.msra.mxu0 0
    %815 = vmatprep.subr.bf16.mxu0 0
    %816 = vmatpush1.bf16.msra.mxu0 0
    %817 = vmatprep.subr.bf16.mxu0 0
    %818 = vmatpush1.bf16.msra.mxu0 0
    %819 = vmatprep.subr.bf16.mxu0 0
    %820 = vmatpush1.bf16.msra.mxu0 0
    %821 = vmatprep.subr.bf16.mxu0 0
    %822 = vmatpush1.bf16.msra.mxu0 0
    %823 = vmatprep.subr.bf16.mxu0 0
    %824 = vmatpush1.bf16.msra.mxu0 0
    %825 = vmatprep.subr.bf16.mxu0 0
    %826 = vmatpush1.bf16.msra.mxu0 0
    %827 = vmatprep.mubr.bf16.mxu0 0
    %828 = vmatmul.mubr.bf16.gmra.mrb[0].mxu0 %v793
    %v829 = vpop.f32.mrb[0].mxu0
    %v830 = vadd.f32 0.0, %v829
    %v831 = vpop.f32.mrb[0].mxu0
    %v832 = vadd.f32 0.0, %v831
    %v833 = vpop.f32.mrb[0].mxu0
    %v834 = vpop.f32.mrb[0].mxu0
    %835 = vdwg.mxu0
    %v836 = vadd.f32 %v786, %v830
    %v837 = vadd.f32 %v787, %v832
    %v838 = vmul.f32 %v836, 0.5
    %v839 = vtanh.pop %v838
    %v840 = vadd.f32 %v839, 1.0
    %v841 = vmul.f32 %v840, 0.5
    %v842 = vtanh.pop %v837
    %v843 = vmul.f32 %v837, 0.5
    %v844 = vtanh.pop %v843
    %v845 = vadd.f32 %v844, 1.0
    %v846 = vmul.f32 %v845, 0.5
    %v847 = vmul.f32 %v841, %v780
    %v848 = vmul.f32 %v841, %v842
    %850 = vrot.lane.b32.xlu0 %v848, 64
    %v851 = vpop.permute.xlu0 %850
    %v853 = vadd.f32 %v847, %v851
    %v854 = vtanh.pop %v853
    %v855 = vmul.f32 %v846, %v854
    %v856 = vpack.c.bf16 %v855, %v855
    %v857 = vld [vmem:[#allocation3] sm:$0xf]
    %v858 = vld [vmem:[#allocation3 + $0x4] sm:$0xf]
    %v859 = vld [vmem:[#allocation3 + $0x8] sm:$0xf]
    %v860 = vld [vmem:[#allocation3 + $0xc] sm:$0xf]
    %v861 = vld [vmem:[#allocation3 + $0x10] sm:$0xf]
    %v862 = vld [vmem:[#allocation3 + $0x14] sm:$0xf]
    %v863 = vld [vmem:[#allocation3 + $0x18] sm:$0xf]
    %v864 = vld [vmem:[#allocation3 + $0x1c] sm:$0xf]
    %v865 = vld [vmem:[%s5] sm:$0x1]
    %v867 = vlaneseq
    %v868 = vshrl.u32 %v867, 7
    %v869 = vsub.s32 0, %v868
    %v870 = vrot.slane %v865, %v869
    %873 = vrot.lane.b32.xlu0 %v856, 64
    %v874 = vpop.permute.xlu0 %873
    %v883 = vunpack.c.l.b16 %v857
    %v884 = vunpack.c.l.b16 %v858
    %v885 = vunpack.c.l.b16 %v859
    %v886 = vunpack.c.l.b16 %v860
    %v887 = vunpack.c.l.b16 %v861
    %v888 = vunpack.c.l.b16 %v862
    %v889 = vunpack.c.l.b16 %v863
    %v890 = vunpack.c.l.b16 %v864
    %v891 = vpack.c.b16 %v884, %v883
    %v892 = vpack.c.b16 %v886, %v885
    %v893 = vpack.c.b16 %v888, %v887
    %v894 = vpack.c.b16 %v890, %v889
    %v900 = vsel %vm126, %v874, 0
    %902 = vmatprep.subr.bf16.mxu0 0
    %903 = vmatpush1.bf16.msra.mxu0 %v891
    %904 = vmatprep.subr.bf16.mxu0 0
    %905 = vmatpush1.bf16.msra.mxu0 %v892
    %906 = vmatprep.subr.bf16.mxu0 0
    %907 = vmatpush1.bf16.msra.mxu0 %v893
    %908 = vmatprep.subr.bf16.mxu0 0
    %909 = vmatpush1.bf16.msra.mxu0 %v894
    %910 = vmatprep.subr.bf16.mxu0 0
    %911 = vmatpush1.bf16.msra.mxu0 0
    %912 = vmatprep.subr.bf16.mxu0 0
    %913 = vmatpush1.bf16.msra.mxu0 0
    %914 = vmatprep.subr.bf16.mxu0 0
    %915 = vmatpush1.bf16.msra.mxu0 0
    %916 = vmatprep.subr.bf16.mxu0 0
    %917 = vmatpush1.bf16.msra.mxu0 0
    %918 = vmatprep.subr.bf16.mxu0 0
    %919 = vmatpush1.bf16.msra.mxu0 0
    %920 = vmatprep.subr.bf16.mxu0 0
    %921 = vmatpush1.bf16.msra.mxu0 0
    %922 = vmatprep.subr.bf16.mxu0 0
    %923 = vmatpush1.bf16.msra.mxu0 0
    %924 = vmatprep.subr.bf16.mxu0 0
    %925 = vmatpush1.bf16.msra.mxu0 0
    %926 = vmatprep.subr.bf16.mxu0 0
    %927 = vmatpush1.bf16.msra.mxu0 0
    %928 = vmatprep.subr.bf16.mxu0 0
    %929 = vmatpush1.bf16.msra.mxu0 0
    %930 = vmatprep.subr.bf16.mxu0 0
    %931 = vmatpush1.bf16.msra.mxu0 0
    %932 = vmatprep.subr.bf16.mxu0 0
    %933 = vmatpush1.bf16.msra.mxu0 0
    %934 = vmatprep.mubr.bf16.mxu0 0
    %935 = vmatmul.mubr.bf16.gmra.mrb[0].mxu0 %v900
    %v936 = vpop.f32.mrb[0].mxu0
    %v937 = vadd.f32 %v870, %v936
    %v938 = vpop.f32.mrb[0].mxu0
    %v939 = vpop.f32.mrb[0].mxu0
    %v940 = vpop.f32.mrb[0].mxu0
    %941 = vdwg.mxu0
    %942 = vst [vmem:[%s6] sm:$0xff] %v937
    // Predicated region
    $region30: #{rnn_classifier_forward.1} parent=1 // pred_check
      _
    $region31: #{rnn_classifier_forward.1} parent=1 // pred_check_branch
      %944 = sbr.rel (0) target = $region33
    $region32: #{rnn_classifier_forward.1} parent=1 // pred_region
      _
    $region33: #{rnn_classifier_forward.1} parent=1 // pred_fallthru
      _
    // Predicated region
    $region34: #{rnn_classifier_forward.1} parent=1 // pred_check
      _
    $region35: #{rnn_classifier_forward.1} parent=1 // pred_check_branch
      %946 = sbr.rel (0) target = $region37
    $region36: #{rnn_classifier_forward.1} parent=1 // pred_region
      _
    $region37: #{rnn_classifier_forward.1} parent=1 // pred_fallthru
      _
    %947 = vsyncpa [#allocation4], 1

</llo_original>
